<compile_context>
chip_gen: v7x
topology: tpu7x:2x2x1
jax: 0.10.0
libtpu: 0.0.40
codegen_flags: <defaults>
</compile_context>

<pallas_src>
import functools
import math

import jax
import jax.numpy as jnp
from jax import lax
from jax.experimental import pallas as pl
from jax.experimental.pallas import tpu as pltpu


def _down2_kernel(alpha_ref, xph_ref, w1_ref, w2_ref, w3_ref, o_ref,
                  y1p_ref, y2p_ref, *, ho, wo):
    """Fused Down2 forward for one image.

    alpha_ref : (1,)                      PReLU slope (SMEM)
    xph_ref   : (1, 4*Cin, (Ho+2)*P)      phase-split, zero-haloed input, flat
    w1_ref    : (32, 9*Cin)               conv_input weights (tap-major K)
    w2_ref    : (32, 9*32)                down (stride-2) weights
    w3_ref    : (Cout, 9*32)              convt_R1 weights
    o_ref     : (1, Cout, Ho*P)           output, NCHW on the pitched grid
    y1p_ref   : (4, 32, (Ho+2)*P)  VMEM   PReLU(conv1) activations, per phase,
                                          flat with top-row/left-col halo
    y2p_ref   : (32, (Ho+3)*P)     VMEM   stride-2 conv activations, flat,
                                          halo all around
    P = Wo+2 is the uniform flat row pitch; columns j in {Wo, Wo+1} of every
    flat row are junk and masked to zero before they are staged.
    """
    f32 = jnp.float32
    pitch = wo + 2
    n = ho * pitch                       # flat compute-grid size per layer
    cin = xph_ref.shape[1] // 4
    c1 = w1_ref.shape[0]
    alpha = alpha_ref[0]

    # Valid-column mask over the flat grid (zero out the 2 junk cols per row).
    col = lax.broadcasted_iota(jnp.int32, (1, n), 1) % pitch
    valid = col < wo

    # ---- halo-only zeroing (interiors are fully rewritten every image) -----
    y1p_ref[:, :, 0:pitch + 1] = jnp.zeros((4, c1, pitch + 1), f32)
    y2p_ref[:, 0:pitch + 1] = jnp.zeros((c1, pitch + 1), f32)
    y2p_ref[:, (ho + 1) * pitch:(ho + 2) * pitch] = jnp.zeros((c1, pitch), f32)

    # ---- layer 1: 3x3 stride-1 conv + PReLU, one deep-K matmul per phase ----
    w1 = w1_ref[...]
    for pr in range(2):
        for pc in range(2):
            pieces = []
            for kh in range(3):
                for kw in range(3):
                    s, qr = (pr + kh) % 2, (pr + kh) // 2
                    t, qc = (pc + kw) % 2, (pc + kw) // 2
                    ph = 2 * s + t
                    off = qr * pitch + qc
                    pieces.append(
                        xph_ref[0, ph * cin:(ph + 1) * cin, off:off + n])
            patch = jnp.concatenate(pieces, axis=0)             # (9*Cin, n)
            v = jnp.dot(w1, patch, preferred_element_type=f32)  # (32, n)
            v = jnp.where(v >= 0.0, v, alpha * v)               # PReLU
            v = jnp.where(valid, v, 0.0)                        # kill junk
            y1p_ref[2 * pr + pc, :, pitch + 1:pitch + 1 + n] = v

    # ---- layer 2: 3x3 stride-2 conv as ONE K=288 matmul over the phases ----
    pieces = []
    for kh in range(3):
        for kw in range(3):
            pr = 0 if kh == 1 else 1
            pc = 0 if kw == 1 else 1
            rh = 0 if kh == 0 else 1
            cw = 0 if kw == 0 else 1
            off = rh * pitch + cw
            pieces.append(y1p_ref[2 * pr + pc, :, off:off + n])  # (32, n)
    patch2 = jnp.concatenate(pieces, axis=0)                     # (288, n)
    y2 = jnp.dot(w2_ref[...], patch2, preferred_element_type=f32)
    y2 = jnp.where(valid, y2, 0.0)
    y2p_ref[:, pitch + 1:pitch + 1 + n] = y2

    # ---- layer 3: 3x3 stride-1 conv, ONE K=288 matmul ----------------------
    pieces = []
    for kh in range(3):
        for kw in range(3):
            off = kh * pitch + kw
            pieces.append(y2p_ref[:, off:off + n])               # (32, n)
    patch3 = jnp.concatenate(pieces, axis=0)                     # (288, n)
    out = jnp.dot(w3_ref[...], patch3, preferred_element_type=f32)  # (Cout, n)
    o_ref[0] = out.astype(o_ref.dtype)                           # lane-dense


@jax.jit
def down2_forward(x_nchw, params):
    """Pallas implementation of Down2.forward. Input/output are NCHW fp32."""
    B, Cin, H, W = x_nchw.shape
    assert H % 2 == 0 and W % 2 == 0, "even spatial dims expected"
    Ho, Wo = H // 2, W // 2
    P = Wo + 2                        # uniform flat row pitch (2 junk cols)
    N = Ho * P                        # flat compute-grid size
    Lx = (Ho + 2) * P                 # flat length of each x phase buffer
    C1 = params["w_in"].shape[-1]     # 32
    Cout = params["w_r1"].shape[-1]

    # Phase-split + halo-pad the (small, Cin-channel) input once in XLA.
    # Input stays NCHW; this single fused prepass is what lets the kernel be
    # completely stride-free (every conv tap is a contiguous flat slice).
    x_big = jnp.pad(x_nchw, ((0, 0), (0, 0), (1, 3), (1, 3)))
    x_ph = jnp.concatenate(
        [x_big[:, :, s::2, t::2] for s in (0, 1) for t in (0, 1)], axis=1)
    x_ph = x_ph.reshape(B, 4 * Cin, Lx)          # (B, 4*Cin, (Ho+2)*P)

    # Weights as (Cout, 9*Cin) matrices: K is tap-major, channel-minor.
    w1m = jnp.transpose(params["w_in"], (3, 0, 1, 2)).reshape(C1, 9 * Cin)
    w2m = jnp.transpose(params["w_down"], (3, 0, 1, 2)).reshape(C1, 9 * C1)
    w3m = jnp.transpose(params["w_r1"], (3, 0, 1, 2)).reshape(Cout, 9 * C1)
    alpha = jnp.reshape(jnp.asarray(params["prelu_alpha"], jnp.float32), (1,))

    flops = 2 * B * 9 * N * (4 * Cin * C1 + C1 * C1 + C1 * Cout)
    bytes_accessed = 4 * (B * 4 * Cin * Lx
                          + 9 * Cin * C1 + 9 * C1 * C1 + 9 * C1 * Cout
                          + B * Cout * N)

    kernel = functools.partial(_down2_kernel, ho=Ho, wo=Wo)
    out_flat = pl.pallas_call(
        kernel,
        out_shape=jax.ShapeDtypeStruct((B, Cout, N), jnp.float32),
        grid=(B,),
        in_specs=[
            pl.BlockSpec(memory_space=pltpu.MemorySpace.SMEM),       # alpha
            pl.BlockSpec((1, 4 * Cin, Lx), lambda b: (b, 0, 0)),     # x phases
            pl.BlockSpec((C1, 9 * Cin), lambda b: (0, 0)),           # w1
            pl.BlockSpec((C1, 9 * C1), lambda b: (0, 0)),            # w2
            pl.BlockSpec((Cout, 9 * C1), lambda b: (0, 0)),          # w3
        ],
        out_specs=pl.BlockSpec((1, Cout, N), lambda b: (b, 0, 0)),
        scratch_shapes=[
            pltpu.VMEM((4, C1, (Ho + 2) * P), jnp.float32),   # y1 phases
            pltpu.VMEM((C1, (Ho + 3) * P), jnp.float32),      # y2 (padded)
        ],
        compiler_params=pltpu.CompilerParams(
            dimension_semantics=("parallel",),
            vmem_limit_bytes=48 * 1024 * 1024),
        cost_estimate=pl.CostEstimate(flops=flops, transcendentals=0,
                                      bytes_accessed=bytes_accessed),
    )(alpha, x_ph, w1m, w2m, w3m)

    # Drop the 2 junk columns per row; reshape is free, slice is tiny (Cout ch).
    return out_flat.reshape(B, Cout, Ho, P)[:, :, :, :Wo]


# ----------------------------- reference (pure JAX) -------------------------
def _conv_ref(x, w, stride):
    return lax.conv_general_dilated(
        x, w, window_strides=(stride, stride), padding=((1, 1), (1, 1)),
        dimension_numbers=("NHWC", "HWIO", "NHWC"))


def ref_forward(x_nchw, p):
    x = jnp.transpose(x_nchw, (0, 2, 3, 1))
    y = _conv_ref(x, p["w_in"], 1)
    y = jnp.where(y >= 0, y, p["prelu_alpha"] * y)
    y = _conv_ref(y, p["w_down"], 2)
    y = _conv_ref(y, p["w_r1"], 1)
    return jnp.transpose(y, (0, 3, 1, 2))


if __name__ == "__main__":
    B, C_IN, C_OUT, H, W = 2, 4, 8, 16, 16
    key = jax.random.PRNGKey(0)
    k1, k2, k3, k4 = jax.random.split(key, 4)

    # Deterministic init mirroring the PyTorch module:
    #   conv weights ~ N(0, sqrt(2 / (k*k*out_channels))), PReLU alpha = 0.25.
    # (weights stored HWIO = (3, 3, Cin, Cout))
    params = {
        "w_in": jax.random.normal(k1, (3, 3, C_IN, 32), jnp.float32)
                * math.sqrt(2.0 / (9 * 32)),
        "w_down": jax.random.normal(k2, (3, 3, 32, 32), jnp.float32)
                  * math.sqrt(2.0 / (9 * 32)),
        "w_r1": jax.random.normal(k3, (3, 3, 32, C_OUT), jnp.float32)
                * math.sqrt(2.0 / (9 * C_OUT)),
        "prelu_alpha": jnp.float32(0.25),
    }
    x = jax.random.normal(k4, (B, C_IN, H, W), jnp.float32)

    out = jax.block_until_ready(down2_forward(x, params))
    ref = jax.block_until_ready(ref_forward(x, params))

    assert out.shape == (B, C_OUT, H // 2, W // 2), out.shape
    max_err = float(jnp.max(jnp.abs(out - ref)))
    if not jnp.allclose(out, ref, atol=1e-3, rtol=1e-3):
        raise AssertionError(f"Pallas vs reference mismatch, max|err|={max_err}")
    print("KERNEL_OK")
</pallas_src>

<mosaic_0001>
module attributes {stable_mosaic.version = 11 : i64} {
  func.func @_down2_kernel(%arg0: i32, %arg1: memref<1xf32, #tpu.memory_space<smem>>, %arg2: memref<1x16x100xf32, #tpu.memory_space<vmem>>, %arg3: memref<32x36xf32, #tpu.memory_space<vmem>>, %arg4: memref<32x288xf32, #tpu.memory_space<vmem>>, %arg5: memref<8x288xf32, #tpu.memory_space<vmem>>, %arg6: memref<1x8x80xf32, #tpu.memory_space<vmem>>, %arg7: memref<4x32x100xf32, #tpu.memory_space<vmem>>, %arg8: memref<32x110xf32, #tpu.memory_space<vmem>>) attributes {dimension_semantics = [#tpu.dimension_semantics<parallel>], iteration_bounds = array<i64: 2>, scalar_prefetch = 0 : i64, scratch_operands = 2 : i64, tpu.core_type = #tpu.core_type<tc>, window_params = [{transform_indices = @transform_0, window_bounds = array<i64: 1>}, {transform_indices = @transform_1, window_bounds = array<i64: 1, 16, 100>}, {pipeline_mode = #tpu.pipeline_mode<synchronous>, transform_indices = @transform_2, window_bounds = array<i64: 32, 36>}, {pipeline_mode = #tpu.pipeline_mode<synchronous>, transform_indices = @transform_3, window_bounds = array<i64: 32, 288>}, {pipeline_mode = #tpu.pipeline_mode<synchronous>, transform_indices = @transform_4, window_bounds = array<i64: 8, 288>}, {transform_indices = @transform_5, window_bounds = array<i64: 1, 8, 80>}]} {
    %c0 = arith.constant 0 : index
    %0 = memref.load %arg1[%c0] : memref<1xf32, #tpu.memory_space<smem>>
    %1 = tpu.iota {dimensions = array<i32: 1>} : vector<1x80xi32>
    %c10_i32 = arith.constant 10 : i32
    %c0_i32 = arith.constant 0 : i32
    %2 = arith.cmpi eq, %c10_i32, %c0_i32 : i32
    %c1_i32 = arith.constant 1 : i32
    %3 = arith.select %2, %c1_i32, %c10_i32 : i32
    %4 = vector.broadcast %3 : i32 to vector<1x80xi32>
    %5 = arith.remsi %1, %4 : vector<1x80xi32>
    %c0_i32_0 = arith.constant 0 : i32
    %6 = vector.broadcast %c0_i32_0 : i32 to vector<1x80xi32>
    %7 = arith.cmpi ne, %5, %6 : vector<1x80xi32>
    %c0_i32_1 = arith.constant 0 : i32
    %8 = vector.broadcast %c0_i32_1 : i32 to vector<1x80xi32>
    %9 = arith.cmpi slt, %5, %8 : vector<1x80xi32>
    %c0_i32_2 = arith.constant 0 : i32
    %10 = arith.cmpi slt, %3, %c0_i32_2 : i32
    %11 = vector.broadcast %10 : i1 to vector<1x80xi1>
    %12 = vector.broadcast %11 : vector<1x80xi1> to vector<1x80xi1>
    %13 = arith.xori %9, %12 : vector<1x80xi1>
    %14 = arith.andi %13, %7 : vector<1x80xi1>
    %15 = vector.broadcast %3 : i32 to vector<1x80xi32>
    %16 = arith.addi %5, %15 : vector<1x80xi32>
    %17 = arith.select %14, %16, %5 : vector<1x80xi1>, vector<1x80xi32>
    %c8_i32 = arith.constant 8 : i32
    %18 = vector.broadcast %c8_i32 : i32 to vector<1x80xi32>
    %19 = arith.cmpi slt, %17, %18 : vector<1x80xi32>
    %cst = arith.constant 0.000000e+00 : f32
    %20 = vector.broadcast %cst : f32 to vector<4x32x11xf32>
    %c0_3 = arith.constant 0 : index
    %c0_4 = arith.constant 0 : index
    %c0_5 = arith.constant 0 : index
    %21 = vector.load %arg7[%c0_3, %c0_4, %c0_5] : memref<4x32x100xf32, #tpu.memory_space<vmem>>, vector<4x32x11xf32>
    tpu.vector_store %arg7[%c0_3, %c0_4, %c0_5], %20 {strides = array<i32>} : memref<4x32x100xf32, #tpu.memory_space<vmem>>, vector<4x32x11xf32>,
    %cst_6 = arith.constant 0.000000e+00 : f32
    %22 = vector.broadcast %cst_6 : f32 to vector<32x11xf32>
    %c0_7 = arith.constant 0 : index
    %c0_8 = arith.constant 0 : index
    %23 = vector.load %arg8[%c0_7, %c0_8] : memref<32x110xf32, #tpu.memory_space<vmem>>, vector<32x11xf32>
    tpu.vector_store %arg8[%c0_7, %c0_8], %22 {strides = array<i32>} : memref<32x110xf32, #tpu.memory_space<vmem>>, vector<32x11xf32>,
    %cst_9 = arith.constant 0.000000e+00 : f32
    %24 = vector.broadcast %cst_9 : f32 to vector<32x10xf32>
    %c0_10 = arith.constant 0 : index
    %c90 = arith.constant 90 : index
    %25 = vector.load %arg8[%c0_10, %c90] : memref<32x110xf32, #tpu.memory_space<vmem>>, vector<32x10xf32>
    tpu.vector_store %arg8[%c0_10, %c90], %24 {strides = array<i32>} : memref<32x110xf32, #tpu.memory_space<vmem>>, vector<32x10xf32>,
    %c0_11 = arith.constant 0 : index
    %c0_12 = arith.constant 0 : index
    %26 = vector.load %arg3[%c0_11, %c0_12] : memref<32x36xf32, #tpu.memory_space<vmem>>, vector<32x36xf32>
    %c0_13 = arith.constant 0 : index
    %c0_14 = arith.constant 0 : index
    %c0_15 = arith.constant 0 : index
    %27 = vector.load %arg2[%c0_13, %c0_14, %c0_15] : memref<1x16x100xf32, #tpu.memory_space<vmem>>, vector<1x4x80xf32>
    %28 = vector.shape_cast %27 : vector<1x4x80xf32> to vector<4x80xf32>
    %c0_16 = arith.constant 0 : index
    %c4 = arith.constant 4 : index
    %c0_17 = arith.constant 0 : index
    %29 = vector.load %arg2[%c0_16, %c4, %c0_17] : memref<1x16x100xf32, #tpu.memory_space<vmem>>, vector<1x4x80xf32>
    %30 = vector.shape_cast %29 : vector<1x4x80xf32> to vector<4x80xf32>
    %c0_18 = arith.constant 0 : index
    %c0_19 = arith.constant 0 : index
    %c1 = arith.constant 1 : index
    %31 = vector.load %arg2[%c0_18, %c0_19, %c1] : memref<1x16x100xf32, #tpu.memory_space<vmem>>, vector<1x4x80xf32>
    %32 = vector.shape_cast %31 : vector<1x4x80xf32> to vector<4x80xf32>
    %c0_20 = arith.constant 0 : index
    %c8 = arith.constant 8 : index
    %c0_21 = arith.constant 0 : index
    %33 = vector.load %arg2[%c0_20, %c8, %c0_21] : memref<1x16x100xf32, #tpu.memory_space<vmem>>, vector<1x4x80xf32>
    %34 = vector.shape_cast %33 : vector<1x4x80xf32> to vector<4x80xf32>
    %c0_22 = arith.constant 0 : index
    %c12 = arith.constant 12 : index
    %c0_23 = arith.constant 0 : index
    %35 = vector.load %arg2[%c0_22, %c12, %c0_23] : memref<1x16x100xf32, #tpu.memory_space<vmem>>, vector<1x4x80xf32>
    %36 = vector.shape_cast %35 : vector<1x4x80xf32> to vector<4x80xf32>
    %c0_24 = arith.constant 0 : index
    %c8_25 = arith.constant 8 : index
    %c1_26 = arith.constant 1 : index
    %37 = vector.load %arg2[%c0_24, %c8_25, %c1_26] : memref<1x16x100xf32, #tpu.memory_space<vmem>>, vector<1x4x80xf32>
    %38 = vector.shape_cast %37 : vector<1x4x80xf32> to vector<4x80xf32>
    %c0_27 = arith.constant 0 : index
    %c0_28 = arith.constant 0 : index
    %c10 = arith.constant 10 : index
    %39 = vector.load %arg2[%c0_27, %c0_28, %c10] : memref<1x16x100xf32, #tpu.memory_space<vmem>>, vector<1x4x80xf32>
    %40 = vector.shape_cast %39 : vector<1x4x80xf32> to vector<4x80xf32>
    %c0_29 = arith.constant 0 : index
    %c4_30 = arith.constant 4 : index
    %c10_31 = arith.constant 10 : index
    %41 = vector.load %arg2[%c0_29, %c4_30, %c10_31] : memref<1x16x100xf32, #tpu.memory_space<vmem>>, vector<1x4x80xf32>
    %42 = vector.shape_cast %41 : vector<1x4x80xf32> to vector<4x80xf32>
    %c0_32 = arith.constant 0 : index
    %c0_33 = arith.constant 0 : index
    %c11 = arith.constant 11 : index
    %43 = vector.load %arg2[%c0_32, %c0_33, %c11] : memref<1x16x100xf32, #tpu.memory_space<vmem>>, vector<1x4x80xf32>
    %44 = vector.shape_cast %43 : vector<1x4x80xf32> to vector<4x80xf32>
    %45 = tpu.concatenate %28, %30, %32, %34, %36, %38, %40, %42, %44 in 0 : vector<4x80xf32>, vector<4x80xf32>, vector<4x80xf32>, vector<4x80xf32>, vector<4x80xf32>, vector<4x80xf32>, vector<4x80xf32>, vector<4x80xf32>, vector<4x80xf32> -> vector<36x80xf32>
    %cst_34 = arith.constant dense<0.000000e+00> : vector<32x80xf32>
    %46 = tpu.matmul %26, %45, %cst_34 {dimension_numbers = #tpu.dot_dimension_numbers<[1], [0], [0], [1], [0, 0, 1, 1], [], []>} : vector<32x36xf32>, vector<36x80xf32>, vector<32x80xf32> -> vector<32x80xf32>
    %cst_35 = arith.constant 0.000000e+00 : f32
    %47 = vector.broadcast %cst_35 : f32 to vector<32x80xf32>
    %48 = arith.cmpf oge, %46, %47 : vector<32x80xf32>
    %49 = vector.broadcast %0 : f32 to vector<32x80xf32>
    %50 = arith.mulf %49, %46 : vector<32x80xf32>
    %51 = arith.select %48, %46, %50 : vector<32x80xi1>, vector<32x80xf32>
    %cst_36 = arith.constant 0.000000e+00 : f32
    %52 = vector.shape_cast %19 : vector<1x80xi1> to vector<1x80xi1>
    %53 = vector.broadcast %52 : vector<1x80xi1> to vector<32x80xi1>
    %54 = vector.broadcast %cst_36 : f32 to vector<32x80xf32>
    %55 = arith.select %53, %51, %54 : vector<32x80xi1>, vector<32x80xf32>
    %c0_37 = arith.constant 0 : index
    %c0_38 = arith.constant 0 : index
    %c11_39 = arith.constant 11 : index
    %56 = vector.load %arg7[%c0_37, %c0_38, %c11_39] : memref<4x32x100xf32, #tpu.memory_space<vmem>>, vector<1x32x80xf32>
    %57 = vector.shape_cast %56 : vector<1x32x80xf32> to vector<32x80xf32>
    %58 = vector.shape_cast %55 : vector<32x80xf32> to vector<1x32x80xf32>
    tpu.vector_store %arg7[%c0_37, %c0_38, %c11_39], %58 {strides = array<i32>} : memref<4x32x100xf32, #tpu.memory_space<vmem>>, vector<1x32x80xf32>,
    %c0_40 = arith.constant 0 : index
    %c4_41 = arith.constant 4 : index
    %c0_42 = arith.constant 0 : index
    %59 = vector.load %arg2[%c0_40, %c4_41, %c0_42] : memref<1x16x100xf32, #tpu.memory_space<vmem>>, vector<1x4x80xf32>
    %60 = vector.shape_cast %59 : vector<1x4x80xf32> to vector<4x80xf32>
    %c0_43 = arith.constant 0 : index
    %c0_44 = arith.constant 0 : index
    %c1_45 = arith.constant 1 : index
    %61 = vector.load %arg2[%c0_43, %c0_44, %c1_45] : memref<1x16x100xf32, #tpu.memory_space<vmem>>, vector<1x4x80xf32>
    %62 = vector.shape_cast %61 : vector<1x4x80xf32> to vector<4x80xf32>
    %c0_46 = arith.constant 0 : index
    %c4_47 = arith.constant 4 : index
    %c1_48 = arith.constant 1 : index
    %63 = vector.load %arg2[%c0_46, %c4_47, %c1_48] : memref<1x16x100xf32, #tpu.memory_space<vmem>>, vector<1x4x80xf32>
    %64 = vector.shape_cast %63 : vector<1x4x80xf32> to vector<4x80xf32>
    %c0_49 = arith.constant 0 : index
    %c12_50 = arith.constant 12 : index
    %c0_51 = arith.constant 0 : index
    %65 = vector.load %arg2[%c0_49, %c12_50, %c0_51] : memref<1x16x100xf32, #tpu.memory_space<vmem>>, vector<1x4x80xf32>
    %66 = vector.shape_cast %65 : vector<1x4x80xf32> to vector<4x80xf32>
    %c0_52 = arith.constant 0 : index
    %c8_53 = arith.constant 8 : index
    %c1_54 = arith.constant 1 : index
    %67 = vector.load %arg2[%c0_52, %c8_53, %c1_54] : memref<1x16x100xf32, #tpu.memory_space<vmem>>, vector<1x4x80xf32>
    %68 = vector.shape_cast %67 : vector<1x4x80xf32> to vector<4x80xf32>
    %c0_55 = arith.constant 0 : index
    %c12_56 = arith.constant 12 : index
    %c1_57 = arith.constant 1 : index
    %69 = vector.load %arg2[%c0_55, %c12_56, %c1_57] : memref<1x16x100xf32, #tpu.memory_space<vmem>>, vector<1x4x80xf32>
    %70 = vector.shape_cast %69 : vector<1x4x80xf32> to vector<4x80xf32>
    %c0_58 = arith.constant 0 : index
    %c4_59 = arith.constant 4 : index
    %c10_60 = arith.constant 10 : index
    %71 = vector.load %arg2[%c0_58, %c4_59, %c10_60] : memref<1x16x100xf32, #tpu.memory_space<vmem>>, vector<1x4x80xf32>
    %72 = vector.shape_cast %71 : vector<1x4x80xf32> to vector<4x80xf32>
    %c0_61 = arith.constant 0 : index
    %c0_62 = arith.constant 0 : index
    %c11_63 = arith.constant 11 : index
    %73 = vector.load %arg2[%c0_61, %c0_62, %c11_63] : memref<1x16x100xf32, #tpu.memory_space<vmem>>, vector<1x4x80xf32>
    %74 = vector.shape_cast %73 : vector<1x4x80xf32> to vector<4x80xf32>
    %c0_64 = arith.constant 0 : index
    %c4_65 = arith.constant 4 : index
    %c11_66 = arith.constant 11 : index
    %75 = vector.load %arg2[%c0_64, %c4_65, %c11_66] : memref<1x16x100xf32, #tpu.memory_space<vmem>>, vector<1x4x80xf32>
    %76 = vector.shape_cast %75 : vector<1x4x80xf32> to vector<4x80xf32>
    %77 = tpu.concatenate %60, %62, %64, %66, %68, %70, %72, %74, %76 in 0 : vector<4x80xf32>, vector<4x80xf32>, vector<4x80xf32>, vector<4x80xf32>, vector<4x80xf32>, vector<4x80xf32>, vector<4x80xf32>, vector<4x80xf32>, vector<4x80xf32> -> vector<36x80xf32>
    %cst_67 = arith.constant dense<0.000000e+00> : vector<32x80xf32>
    %78 = tpu.matmul %26, %77, %cst_67 {dimension_numbers = #tpu.dot_dimension_numbers<[1], [0], [0], [1], [0, 0, 1, 1], [], []>} : vector<32x36xf32>, vector<36x80xf32>, vector<32x80xf32> -> vector<32x80xf32>
    %cst_68 = arith.constant 0.000000e+00 : f32
    %79 = vector.broadcast %cst_68 : f32 to vector<32x80xf32>
    %80 = arith.cmpf oge, %78, %79 : vector<32x80xf32>
    %81 = vector.broadcast %0 : f32 to vector<32x80xf32>
    %82 = arith.mulf %81, %78 : vector<32x80xf32>
    %83 = arith.select %80, %78, %82 : vector<32x80xi1>, vector<32x80xf32>
    %cst_69 = arith.constant 0.000000e+00 : f32
    %84 = vector.shape_cast %19 : vector<1x80xi1> to vector<1x80xi1>
    %85 = vector.broadcast %84 : vector<1x80xi1> to vector<32x80xi1>
    %86 = vector.broadcast %cst_69 : f32 to vector<32x80xf32>
    %87 = arith.select %85, %83, %86 : vector<32x80xi1>, vector<32x80xf32>
    %c1_70 = arith.constant 1 : index
    %c0_71 = arith.constant 0 : index
    %c11_72 = arith.constant 11 : index
    %88 = vector.load %arg7[%c1_70, %c0_71, %c11_72] : memref<4x32x100xf32, #tpu.memory_space<vmem>>, vector<1x32x80xf32>
    %89 = vector.shape_cast %88 : vector<1x32x80xf32> to vector<32x80xf32>
    %90 = vector.shape_cast %87 : vector<32x80xf32> to vector<1x32x80xf32>
    tpu.vector_store %arg7[%c1_70, %c0_71, %c11_72], %90 {strides = array<i32>} : memref<4x32x100xf32, #tpu.memory_space<vmem>>, vector<1x32x80xf32>,
    %c0_73 = arith.constant 0 : index
    %c8_74 = arith.constant 8 : index
    %c0_75 = arith.constant 0 : index
    %91 = vector.load %arg2[%c0_73, %c8_74, %c0_75] : memref<1x16x100xf32, #tpu.memory_space<vmem>>, vector<1x4x80xf32>
    %92 = vector.shape_cast %91 : vector<1x4x80xf32> to vector<4x80xf32>
    %c0_76 = arith.constant 0 : index
    %c12_77 = arith.constant 12 : index
    %c0_78 = arith.constant 0 : index
    %93 = vector.load %arg2[%c0_76, %c12_77, %c0_78] : memref<1x16x100xf32, #tpu.memory_space<vmem>>, vector<1x4x80xf32>
    %94 = vector.shape_cast %93 : vector<1x4x80xf32> to vector<4x80xf32>
    %c0_79 = arith.constant 0 : index
    %c8_80 = arith.constant 8 : index
    %c1_81 = arith.constant 1 : index
    %95 = vector.load %arg2[%c0_79, %c8_80, %c1_81] : memref<1x16x100xf32, #tpu.memory_space<vmem>>, vector<1x4x80xf32>
    %96 = vector.shape_cast %95 : vector<1x4x80xf32> to vector<4x80xf32>
    %c0_82 = arith.constant 0 : index
    %c0_83 = arith.constant 0 : index
    %c10_84 = arith.constant 10 : index
    %97 = vector.load %arg2[%c0_82, %c0_83, %c10_84] : memref<1x16x100xf32, #tpu.memory_space<vmem>>, vector<1x4x80xf32>
    %98 = vector.shape_cast %97 : vector<1x4x80xf32> to vector<4x80xf32>
    %c0_85 = arith.constant 0 : index
    %c4_86 = arith.constant 4 : index
    %c10_87 = arith.constant 10 : index
    %99 = vector.load %arg2[%c0_85, %c4_86, %c10_87] : memref<1x16x100xf32, #tpu.memory_space<vmem>>, vector<1x4x80xf32>
    %100 = vector.shape_cast %99 : vector<1x4x80xf32> to vector<4x80xf32>
    %c0_88 = arith.constant 0 : index
    %c0_89 = arith.constant 0 : index
    %c11_90 = arith.constant 11 : index
    %101 = vector.load %arg2[%c0_88, %c0_89, %c11_90] : memref<1x16x100xf32, #tpu.memory_space<vmem>>, vector<1x4x80xf32>
    %102 = vector.shape_cast %101 : vector<1x4x80xf32> to vector<4x80xf32>
    %c0_91 = arith.constant 0 : index
    %c8_92 = arith.constant 8 : index
    %c10_93 = arith.constant 10 : index
    %103 = vector.load %arg2[%c0_91, %c8_92, %c10_93] : memref<1x16x100xf32, #tpu.memory_space<vmem>>, vector<1x4x80xf32>
    %104 = vector.shape_cast %103 : vector<1x4x80xf32> to vector<4x80xf32>
    %c0_94 = arith.constant 0 : index
    %c12_95 = arith.constant 12 : index
    %c10_96 = arith.constant 10 : index
    %105 = vector.load %arg2[%c0_94, %c12_95, %c10_96] : memref<1x16x100xf32, #tpu.memory_space<vmem>>, vector<1x4x80xf32>
    %106 = vector.shape_cast %105 : vector<1x4x80xf32> to vector<4x80xf32>
    %c0_97 = arith.constant 0 : index
    %c8_98 = arith.constant 8 : index
    %c11_99 = arith.constant 11 : index
    %107 = vector.load %arg2[%c0_97, %c8_98, %c11_99] : memref<1x16x100xf32, #tpu.memory_space<vmem>>, vector<1x4x80xf32>
    %108 = vector.shape_cast %107 : vector<1x4x80xf32> to vector<4x80xf32>
    %109 = tpu.concatenate %92, %94, %96, %98, %100, %102, %104, %106, %108 in 0 : vector<4x80xf32>, vector<4x80xf32>, vector<4x80xf32>, vector<4x80xf32>, vector<4x80xf32>, vector<4x80xf32>, vector<4x80xf32>, vector<4x80xf32>, vector<4x80xf32> -> vector<36x80xf32>
    %cst_100 = arith.constant dense<0.000000e+00> : vector<32x80xf32>
    %110 = tpu.matmul %26, %109, %cst_100 {dimension_numbers = #tpu.dot_dimension_numbers<[1], [0], [0], [1], [0, 0, 1, 1], [], []>} : vector<32x36xf32>, vector<36x80xf32>, vector<32x80xf32> -> vector<32x80xf32>
    %cst_101 = arith.constant 0.000000e+00 : f32
    %111 = vector.broadcast %cst_101 : f32 to vector<32x80xf32>
    %112 = arith.cmpf oge, %110, %111 : vector<32x80xf32>
    %113 = vector.broadcast %0 : f32 to vector<32x80xf32>
    %114 = arith.mulf %113, %110 : vector<32x80xf32>
    %115 = arith.select %112, %110, %114 : vector<32x80xi1>, vector<32x80xf32>
    %cst_102 = arith.constant 0.000000e+00 : f32
    %116 = vector.shape_cast %19 : vector<1x80xi1> to vector<1x80xi1>
    %117 = vector.broadcast %116 : vector<1x80xi1> to vector<32x80xi1>
    %118 = vector.broadcast %cst_102 : f32 to vector<32x80xf32>
    %119 = arith.select %117, %115, %118 : vector<32x80xi1>, vector<32x80xf32>
    %c2 = arith.constant 2 : index
    %c0_103 = arith.constant 0 : index
    %c11_104 = arith.constant 11 : index
    %120 = vector.load %arg7[%c2, %c0_103, %c11_104] : memref<4x32x100xf32, #tpu.memory_space<vmem>>, vector<1x32x80xf32>
    %121 = vector.shape_cast %120 : vector<1x32x80xf32> to vector<32x80xf32>
    %122 = vector.shape_cast %119 : vector<32x80xf32> to vector<1x32x80xf32>
    tpu.vector_store %arg7[%c2, %c0_103, %c11_104], %122 {strides = array<i32>} : memref<4x32x100xf32, #tpu.memory_space<vmem>>, vector<1x32x80xf32>,
    %c0_105 = arith.constant 0 : index
    %c12_106 = arith.constant 12 : index
    %c0_107 = arith.constant 0 : index
    %123 = vector.load %arg2[%c0_105, %c12_106, %c0_107] : memref<1x16x100xf32, #tpu.memory_space<vmem>>, vector<1x4x80xf32>
    %124 = vector.shape_cast %123 : vector<1x4x80xf32> to vector<4x80xf32>
    %c0_108 = arith.constant 0 : index
    %c8_109 = arith.constant 8 : index
    %c1_110 = arith.constant 1 : index
    %125 = vector.load %arg2[%c0_108, %c8_109, %c1_110] : memref<1x16x100xf32, #tpu.memory_space<vmem>>, vector<1x4x80xf32>
    %126 = vector.shape_cast %125 : vector<1x4x80xf32> to vector<4x80xf32>
    %c0_111 = arith.constant 0 : index
    %c12_112 = arith.constant 12 : index
    %c1_113 = arith.constant 1 : index
    %127 = vector.load %arg2[%c0_111, %c12_112, %c1_113] : memref<1x16x100xf32, #tpu.memory_space<vmem>>, vector<1x4x80xf32>
    %128 = vector.shape_cast %127 : vector<1x4x80xf32> to vector<4x80xf32>
    %c0_114 = arith.constant 0 : index
    %c4_115 = arith.constant 4 : index
    %c10_116 = arith.constant 10 : index
    %129 = vector.load %arg2[%c0_114, %c4_115, %c10_116] : memref<1x16x100xf32, #tpu.memory_space<vmem>>, vector<1x4x80xf32>
    %130 = vector.shape_cast %129 : vector<1x4x80xf32> to vector<4x80xf32>
    %c0_117 = arith.constant 0 : index
    %c0_118 = arith.constant 0 : index
    %c11_119 = arith.constant 11 : index
    %131 = vector.load %arg2[%c0_117, %c0_118, %c11_119] : memref<1x16x100xf32, #tpu.memory_space<vmem>>, vector<1x4x80xf32>
    %132 = vector.shape_cast %131 : vector<1x4x80xf32> to vector<4x80xf32>
    %c0_120 = arith.constant 0 : index
    %c4_121 = arith.constant 4 : index
    %c11_122 = arith.constant 11 : index
    %133 = vector.load %arg2[%c0_120, %c4_121, %c11_122] : memref<1x16x100xf32, #tpu.memory_space<vmem>>, vector<1x4x80xf32>
    %134 = vector.shape_cast %133 : vector<1x4x80xf32> to vector<4x80xf32>
    %c0_123 = arith.constant 0 : index
    %c12_124 = arith.constant 12 : index
    %c10_125 = arith.constant 10 : index
    %135 = vector.load %arg2[%c0_123, %c12_124, %c10_125] : memref<1x16x100xf32, #tpu.memory_space<vmem>>, vector<1x4x80xf32>
    %136 = vector.shape_cast %135 : vector<1x4x80xf32> to vector<4x80xf32>
    %c0_126 = arith.constant 0 : index
    %c8_127 = arith.constant 8 : index
    %c11_128 = arith.constant 11 : index
    %137 = vector.load %arg2[%c0_126, %c8_127, %c11_128] : memref<1x16x100xf32, #tpu.memory_space<vmem>>, vector<1x4x80xf32>
    %138 = vector.shape_cast %137 : vector<1x4x80xf32> to vector<4x80xf32>
    %c0_129 = arith.constant 0 : index
    %c12_130 = arith.constant 12 : index
    %c11_131 = arith.constant 11 : index
    %139 = vector.load %arg2[%c0_129, %c12_130, %c11_131] : memref<1x16x100xf32, #tpu.memory_space<vmem>>, vector<1x4x80xf32>
    %140 = vector.shape_cast %139 : vector<1x4x80xf32> to vector<4x80xf32>
    %141 = tpu.concatenate %124, %126, %128, %130, %132, %134, %136, %138, %140 in 0 : vector<4x80xf32>, vector<4x80xf32>, vector<4x80xf32>, vector<4x80xf32>, vector<4x80xf32>, vector<4x80xf32>, vector<4x80xf32>, vector<4x80xf32>, vector<4x80xf32> -> vector<36x80xf32>
    %cst_132 = arith.constant dense<0.000000e+00> : vector<32x80xf32>
    %142 = tpu.matmul %26, %141, %cst_132 {dimension_numbers = #tpu.dot_dimension_numbers<[1], [0], [0], [1], [0, 0, 1, 1], [], []>} : vector<32x36xf32>, vector<36x80xf32>, vector<32x80xf32> -> vector<32x80xf32>
    %cst_133 = arith.constant 0.000000e+00 : f32
    %143 = vector.broadcast %cst_133 : f32 to vector<32x80xf32>
    %144 = arith.cmpf oge, %142, %143 : vector<32x80xf32>
    %145 = vector.broadcast %0 : f32 to vector<32x80xf32>
    %146 = arith.mulf %145, %142 : vector<32x80xf32>
    %147 = arith.select %144, %142, %146 : vector<32x80xi1>, vector<32x80xf32>
    %cst_134 = arith.constant 0.000000e+00 : f32
    %148 = vector.shape_cast %19 : vector<1x80xi1> to vector<1x80xi1>
    %149 = vector.broadcast %148 : vector<1x80xi1> to vector<32x80xi1>
    %150 = vector.broadcast %cst_134 : f32 to vector<32x80xf32>
    %151 = arith.select %149, %147, %150 : vector<32x80xi1>, vector<32x80xf32>
    %c3 = arith.constant 3 : index
    %c0_135 = arith.constant 0 : index
    %c11_136 = arith.constant 11 : index
    %152 = vector.load %arg7[%c3, %c0_135, %c11_136] : memref<4x32x100xf32, #tpu.memory_space<vmem>>, vector<1x32x80xf32>
    %153 = vector.shape_cast %152 : vector<1x32x80xf32> to vector<32x80xf32>
    %154 = vector.shape_cast %151 : vector<32x80xf32> to vector<1x32x80xf32>
    tpu.vector_store %arg7[%c3, %c0_135, %c11_136], %154 {strides = array<i32>} : memref<4x32x100xf32, #tpu.memory_space<vmem>>, vector<1x32x80xf32>,
    %c3_137 = arith.constant 3 : index
    %c0_138 = arith.constant 0 : index
    %c0_139 = arith.constant 0 : index
    %155 = vector.load %arg7[%c3_137, %c0_138, %c0_139] : memref<4x32x100xf32, #tpu.memory_space<vmem>>, vector<1x32x80xf32>
    %156 = vector.shape_cast %155 : vector<1x32x80xf32> to vector<32x80xf32>
    %c2_140 = arith.constant 2 : index
    %c0_141 = arith.constant 0 : index
    %c1_142 = arith.constant 1 : index
    %157 = vector.load %arg7[%c2_140, %c0_141, %c1_142] : memref<4x32x100xf32, #tpu.memory_space<vmem>>, vector<1x32x80xf32>
    %158 = vector.shape_cast %157 : vector<1x32x80xf32> to vector<32x80xf32>
    %c3_143 = arith.constant 3 : index
    %c0_144 = arith.constant 0 : index
    %c1_145 = arith.constant 1 : index
    %159 = vector.load %arg7[%c3_143, %c0_144, %c1_145] : memref<4x32x100xf32, #tpu.memory_space<vmem>>, vector<1x32x80xf32>
    %160 = vector.shape_cast %159 : vector<1x32x80xf32> to vector<32x80xf32>
    %c1_146 = arith.constant 1 : index
    %c0_147 = arith.constant 0 : index
    %c10_148 = arith.constant 10 : index
    %161 = vector.load %arg7[%c1_146, %c0_147, %c10_148] : memref<4x32x100xf32, #tpu.memory_space<vmem>>, vector<1x32x80xf32>
    %162 = vector.shape_cast %161 : vector<1x32x80xf32> to vector<32x80xf32>
    %c0_149 = arith.constant 0 : index
    %c0_150 = arith.constant 0 : index
    %c11_151 = arith.constant 11 : index
    %163 = vector.load %arg7[%c0_149, %c0_150, %c11_151] : memref<4x32x100xf32, #tpu.memory_space<vmem>>, vector<1x32x80xf32>
    %164 = vector.shape_cast %163 : vector<1x32x80xf32> to vector<32x80xf32>
    %c1_152 = arith.constant 1 : index
    %c0_153 = arith.constant 0 : index
    %c11_154 = arith.constant 11 : index
    %165 = vector.load %arg7[%c1_152, %c0_153, %c11_154] : memref<4x32x100xf32, #tpu.memory_space<vmem>>, vector<1x32x80xf32>
    %166 = vector.shape_cast %165 : vector<1x32x80xf32> to vector<32x80xf32>
    %c3_155 = arith.constant 3 : index
    %c0_156 = arith.constant 0 : index
    %c10_157 = arith.constant 10 : index
    %167 = vector.load %arg7[%c3_155, %c0_156, %c10_157] : memref<4x32x100xf32, #tpu.memory_space<vmem>>, vector<1x32x80xf32>
    %168 = vector.shape_cast %167 : vector<1x32x80xf32> to vector<32x80xf32>
    %c2_158 = arith.constant 2 : index
    %c0_159 = arith.constant 0 : index
    %c11_160 = arith.constant 11 : index
    %169 = vector.load %arg7[%c2_158, %c0_159, %c11_160] : memref<4x32x100xf32, #tpu.memory_space<vmem>>, vector<1x32x80xf32>
    %170 = vector.shape_cast %169 : vector<1x32x80xf32> to vector<32x80xf32>
    %c3_161 = arith.constant 3 : index
    %c0_162 = arith.constant 0 : index
    %c11_163 = arith.constant 11 : index
    %171 = vector.load %arg7[%c3_161, %c0_162, %c11_163] : memref<4x32x100xf32, #tpu.memory_space<vmem>>, vector<1x32x80xf32>
    %172 = vector.shape_cast %171 : vector<1x32x80xf32> to vector<32x80xf32>
    %173 = tpu.concatenate %156, %158, %160, %162, %164, %166, %168, %170, %172 in 0 : vector<32x80xf32>, vector<32x80xf32>, vector<32x80xf32>, vector<32x80xf32>, vector<32x80xf32>, vector<32x80xf32>, vector<32x80xf32>, vector<32x80xf32>, vector<32x80xf32> -> vector<288x80xf32>
    %c0_164 = arith.constant 0 : index
    %c0_165 = arith.constant 0 : index
    %174 = vector.load %arg4[%c0_164, %c0_165] : memref<32x288xf32, #tpu.memory_space<vmem>>, vector<32x288xf32>
    %cst_166 = arith.constant dense<0.000000e+00> : vector<32x80xf32>
    %175 = tpu.matmul %174, %173, %cst_166 {dimension_numbers = #tpu.dot_dimension_numbers<[1], [0], [0], [1], [0, 0, 1, 1], [], []>} : vector<32x288xf32>, vector<288x80xf32>, vector<32x80xf32> -> vector<32x80xf32>
    %cst_167 = arith.constant 0.000000e+00 : f32
    %176 = vector.shape_cast %19 : vector<1x80xi1> to vector<1x80xi1>
    %177 = vector.broadcast %176 : vector<1x80xi1> to vector<32x80xi1>
    %178 = vector.broadcast %cst_167 : f32 to vector<32x80xf32>
    %179 = arith.select %177, %175, %178 : vector<32x80xi1>, vector<32x80xf32>
    %c0_168 = arith.constant 0 : index
    %c11_169 = arith.constant 11 : index
    %180 = vector.load %arg8[%c0_168, %c11_169] : memref<32x110xf32, #tpu.memory_space<vmem>>, vector<32x80xf32>
    tpu.vector_store %arg8[%c0_168, %c11_169], %179 {strides = array<i32>} : memref<32x110xf32, #tpu.memory_space<vmem>>, vector<32x80xf32>,
    %c0_170 = arith.constant 0 : index
    %c0_171 = arith.constant 0 : index
    %181 = vector.load %arg8[%c0_170, %c0_171] : memref<32x110xf32, #tpu.memory_space<vmem>>, vector<32x80xf32>
    %c0_172 = arith.constant 0 : index
    %c1_173 = arith.constant 1 : index
    %182 = vector.load %arg8[%c0_172, %c1_173] : memref<32x110xf32, #tpu.memory_space<vmem>>, vector<32x80xf32>
    %c0_174 = arith.constant 0 : index
    %c2_175 = arith.constant 2 : index
    %183 = vector.load %arg8[%c0_174, %c2_175] : memref<32x110xf32, #tpu.memory_space<vmem>>, vector<32x80xf32>
    %c0_176 = arith.constant 0 : index
    %c10_177 = arith.constant 10 : index
    %184 = vector.load %arg8[%c0_176, %c10_177] : memref<32x110xf32, #tpu.memory_space<vmem>>, vector<32x80xf32>
    %c0_178 = arith.constant 0 : index
    %c11_179 = arith.constant 11 : index
    %185 = vector.load %arg8[%c0_178, %c11_179] : memref<32x110xf32, #tpu.memory_space<vmem>>, vector<32x80xf32>
    %c0_180 = arith.constant 0 : index
    %c12_181 = arith.constant 12 : index
    %186 = vector.load %arg8[%c0_180, %c12_181] : memref<32x110xf32, #tpu.memory_space<vmem>>, vector<32x80xf32>
    %c0_182 = arith.constant 0 : index
    %c20 = arith.constant 20 : index
    %187 = vector.load %arg8[%c0_182, %c20] : memref<32x110xf32, #tpu.memory_space<vmem>>, vector<32x80xf32>
    %c0_183 = arith.constant 0 : index
    %c21 = arith.constant 21 : index
    %188 = vector.load %arg8[%c0_183, %c21] : memref<32x110xf32, #tpu.memory_space<vmem>>, vector<32x80xf32>
    %c0_184 = arith.constant 0 : index
    %c22 = arith.constant 22 : index
    %189 = vector.load %arg8[%c0_184, %c22] : memref<32x110xf32, #tpu.memory_space<vmem>>, vector<32x80xf32>
    %190 = tpu.concatenate %181, %182, %183, %184, %185, %186, %187, %188, %189 in 0 : vector<32x80xf32>, vector<32x80xf32>, vector<32x80xf32>, vector<32x80xf32>, vector<32x80xf32>, vector<32x80xf32>, vector<32x80xf32>, vector<32x80xf32>, vector<32x80xf32> -> vector<288x80xf32>
    %c0_185 = arith.constant 0 : index
    %c0_186 = arith.constant 0 : index
    %191 = vector.load %arg5[%c0_185, %c0_186] : memref<8x288xf32, #tpu.memory_space<vmem>>, vector<8x288xf32>
    %cst_187 = arith.constant dense<0.000000e+00> : vector<8x80xf32>
    %192 = tpu.matmul %191, %190, %cst_187 {dimension_numbers = #tpu.dot_dimension_numbers<[1], [0], [0], [1], [0, 0, 1, 1], [], []>} : vector<8x288xf32>, vector<288x80xf32>, vector<8x80xf32> -> vector<8x80xf32>
    %c0_188 = arith.constant 0 : index
    %c0_189 = arith.constant 0 : index
    %c0_190 = arith.constant 0 : index
    %193 = vector.load %arg6[%c0_188, %c0_189, %c0_190] : memref<1x8x80xf32, #tpu.memory_space<vmem>>, vector<1x8x80xf32>
    %194 = vector.shape_cast %193 : vector<1x8x80xf32> to vector<8x80xf32>
    %195 = vector.shape_cast %192 : vector<8x80xf32> to vector<1x8x80xf32>
    tpu.vector_store %arg6[%c0_188, %c0_189, %c0_190], %195 {strides = array<i32>} : memref<1x8x80xf32, #tpu.memory_space<vmem>>, vector<1x8x80xf32>,
    return
  }
  func.func @transform_0(%arg0: i32) -> i32 {
    %c0_i32 = arith.constant 0 : i32
    %c0_i32_0 = arith.constant 0 : i32
    return %c0_i32 : i32
  }
  func.func @transform_1(%arg0: i32) -> (i32, i32, i32) {
    %c0_i32 = arith.constant 0 : i32
    %c0_i32_0 = arith.constant 0 : i32
    %c0_i32_1 = arith.constant 0 : i32
    return %arg0, %c0_i32, %c0_i32_0 : i32, i32, i32
  }
  func.func @transform_2(%arg0: i32) -> (i32, i32) {
    %c0_i32 = arith.constant 0 : i32
    %c0_i32_0 = arith.constant 0 : i32
    %c0_i32_1 = arith.constant 0 : i32
    return %c0_i32, %c0_i32_0 : i32, i32
  }
  func.func @transform_3(%arg0: i32) -> (i32, i32) {
    %c0_i32 = arith.constant 0 : i32
    %c0_i32_0 = arith.constant 0 : i32
    %c0_i32_1 = arith.constant 0 : i32
    return %c0_i32, %c0_i32_0 : i32, i32
  }
  func.func @transform_4(%arg0: i32) -> (i32, i32) {
    %c0_i32 = arith.constant 0 : i32
    %c0_i32_0 = arith.constant 0 : i32
    %c0_i32_1 = arith.constant 0 : i32
    return %c0_i32, %c0_i32_0 : i32, i32
  }
  func.func @transform_5(%arg0: i32) -> (i32, i32, i32) {
    %c0_i32 = arith.constant 0 : i32
    %c0_i32_0 = arith.constant 0 : i32
    %c0_i32_1 = arith.constant 0 : i32
    return %arg0, %c0_i32, %c0_i32_0 : i32, i32, i32
  }
}

</mosaic_0001>

<llo_original>
// kernel: down2_forward.1
$region0: #{down2_forward.1}
  #allocation0 [shape = 'u32[]', space=smem, size = 0x4, offset = 0x4, fixed_abs, tag = 'smem constant byte address 0x4 - core index']
  #allocation1 [shape = 'u32[144,128]{1,0:T(1,128)}', space=vmem, size = 0x12000, scoped, tag = 'internal scratch']
  #allocation2 [shape = 'f32[4,32,100]{2,1,0:T(8,128)}', space=vmem, size = 0x10000, scoped, tag = 'scratch operand']
  #allocation3 [shape = 'f32[32,110]{1,0:T(8,128)}', space=vmem, size = 0x4000, scoped, tag = 'scratch operand']
  #allocation4 [shape = 'f32[1]{0:T(128)S(6)}', space=smem, size = 0x200, scoped, tag = 'scoped memory for down2_forward.1']
  %s0 = inlined_call_operand.<no memory space> [shape: f32[1], index: 0, kind: input, shape index: {}]
  %s1 = inlined_call_operand.vmem [shape: f32[2,16,100], index: 1, kind: input, shape index: {}]
  %s2 = inlined_call_operand.vmem [shape: f32[32,36], index: 2, kind: input, shape index: {}]
  %s3 = inlined_call_operand.vmem [shape: f32[32,288], index: 3, kind: input, shape index: {}]
  %s4 = inlined_call_operand.vmem [shape: f32[8,288], index: 4, kind: input, shape index: {}]
  %s5 = inlined_call_operand.vmem [shape: f32[2,8,80], index: 5, kind: output, shape index: {}]
  %s6 = sld [smem:[#allocation0]]
  $region53: #{down2_forward.1} parent=0
    _
  %s8 = ssub.s32 1, %s6
  %s9 = scalar_select 0, %s8, %s6
  %10 = sst [smem:[#allocation4]] %s0
  loop: start=0, step=1, limit=4
  $region2: #{down2_forward.1} parent=0 // loop_pre_header
    _
  $region3: #{down2_forward.1} parent=0 // loop_header
    %s12 = sphi 0, %s16
    %p13 = scmp.ge.s32.totalorder %s12, 4
    %s20 = sphi 0, %s20
    %s22 = sphi 0, %s20
    %s23 = sphi 0, %s22
    %s37 = sphi 0, %s23
    %s43 = sphi 0, %s45
    %s46 = sphi 0, %s43
    %s47 = sphi 0, %s46
    %s63 = sphi 0, %s47
    %s67 = sphi 0, %s67
    %s69 = sphi 0, %s67
    %s70 = sphi 0, %s69
    %s84 = sphi 0, %s70
    %s88 = sphi 0, %s88
    %s90 = sphi 0, %s88
    %s91 = sphi 0, %s90
    %s105 = sphi 0, %s91
    %s109 = sphi 0, %s109
    %s111 = sphi 0, %s109
    %s112 = sphi 0, %s111
    %s126 = sphi 0, %s112
    %s132 = sphi 0, %s134
    %s135 = sphi 0, %s132
    %s136 = sphi 0, %s135
    %s152 = sphi 0, %s136
  $region4: #{down2_forward.1} parent=0 // loop_header_branch
    %15 = sbr.rel (%p13) target = $region8
  $region5: #{down2_forward.1} parent=0 // loop_body
    %s17 = ssub.s32 %s12, 1
    %s18 = ssub.s32 %s12, 2
    %s19 = sadd.s32 %s12, 1
    %s21 = sadd.s32 %s20, 1
    %p24 = scmp.eq.s32.totalorder %s12, 1
    %p25 = scmp.ne.s32.totalorder %s20, %s22
    %p26 = scmp.eq.s32.totalorder %s12, 0
    %p27 = por %p25, %p26
    %p28 = scmp.ne.s32.totalorder %s20, %s22
    %p29 = scmp.eq.s32.totalorder %s17, 1
    %p30 = por %p28, %p29
    %p31 = scmp.ne.s32.totalorder %s22, %s23
    %p32 = scmp.eq.s32.totalorder %s17, 0
    %p33 = por %p31, %p32
    %p34 = scmp.ne.s32.totalorder %s22, %s23
    %p35 = scmp.eq.s32.totalorder %s18, 1
    %p36 = por %p34, %p35
    %p38 = scmp.ne.s32.totalorder %s23, %s37
    %p39 = scmp.eq.s32.totalorder %s18, 0
    %p40 = por %p38, %p39
    %s41 = ssub.s32 %s12, %s19
    %p42 = scmp.eq.s32.totalorder %s41, 0
    %s44 = sadd.s32 %s43, 1
    %s45 = scalar_select %p42, %s43, %s44
    %p48 = pneg %p42
    %p49 = scmp.eq.s32.totalorder %s12, 1
    %p50 = por %p48, %p49
    %p51 = scmp.ne.s32.totalorder %s43, %s46
    %p52 = scmp.eq.s32.totalorder %s12, 0
    %p53 = por %p51, %p52
    %p54 = scmp.ne.s32.totalorder %s43, %s46
    %p55 = scmp.eq.s32.totalorder %s17, 1
    %p56 = por %p54, %p55
    %p57 = scmp.ne.s32.totalorder %s46, %s47
    %p58 = scmp.eq.s32.totalorder %s17, 0
    %p59 = por %p57, %p58
    %p60 = scmp.ne.s32.totalorder %s46, %s47
    %p61 = scmp.eq.s32.totalorder %s18, 1
    %p62 = por %p60, %p61
    %p64 = scmp.ne.s32.totalorder %s47, %s63
    %p65 = scmp.eq.s32.totalorder %s18, 0
    %p66 = por %p64, %p65
    %s68 = sadd.s32 %s67, 1
    %p71 = scmp.eq.s32.totalorder %s12, 1
    %p72 = scmp.ne.s32.totalorder %s67, %s69
    %p73 = scmp.eq.s32.totalorder %s12, 0
    %p74 = por %p72, %p73
    %p75 = scmp.ne.s32.totalorder %s67, %s69
    %p76 = scmp.eq.s32.totalorder %s17, 1
    %p77 = por %p75, %p76
    %p78 = scmp.ne.s32.totalorder %s69, %s70
    %p79 = scmp.eq.s32.totalorder %s17, 0
    %p80 = por %p78, %p79
    %p81 = scmp.ne.s32.totalorder %s69, %s70
    %p82 = scmp.eq.s32.totalorder %s18, 1
    %p83 = por %p81, %p82
    %p85 = scmp.ne.s32.totalorder %s70, %s84
    %p86 = scmp.eq.s32.totalorder %s18, 0
    %p87 = por %p85, %p86
    %s89 = sadd.s32 %s88, 1
    %p92 = scmp.eq.s32.totalorder %s12, 1
    %p93 = scmp.ne.s32.totalorder %s88, %s90
    %p94 = scmp.eq.s32.totalorder %s12, 0
    %p95 = por %p93, %p94
    %p96 = scmp.ne.s32.totalorder %s88, %s90
    %p97 = scmp.eq.s32.totalorder %s17, 1
    %p98 = por %p96, %p97
    %p99 = scmp.ne.s32.totalorder %s90, %s91
    %p100 = scmp.eq.s32.totalorder %s17, 0
    %p101 = por %p99, %p100
    %p102 = scmp.ne.s32.totalorder %s90, %s91
    %p103 = scmp.eq.s32.totalorder %s18, 1
    %p104 = por %p102, %p103
    %p106 = scmp.ne.s32.totalorder %s91, %s105
    %p107 = scmp.eq.s32.totalorder %s18, 0
    %p108 = por %p106, %p107
    %s110 = sadd.s32 %s109, 1
    %p113 = scmp.eq.s32.totalorder %s12, 1
    %p114 = scmp.ne.s32.totalorder %s109, %s111
    %p115 = scmp.eq.s32.totalorder %s12, 0
    %p116 = por %p114, %p115
    %p117 = scmp.ne.s32.totalorder %s109, %s111
    %p118 = scmp.eq.s32.totalorder %s17, 1
    %p119 = por %p117, %p118
    %p120 = scmp.ne.s32.totalorder %s111, %s112
    %p121 = scmp.eq.s32.totalorder %s17, 0
    %p122 = por %p120, %p121
    %p123 = scmp.ne.s32.totalorder %s111, %s112
    %p124 = scmp.eq.s32.totalorder %s18, 1
    %p125 = por %p123, %p124
    %p127 = scmp.ne.s32.totalorder %s112, %s126
    %p128 = scmp.eq.s32.totalorder %s18, 0
    %p129 = por %p127, %p128
    %s130 = ssub.s32 %s12, %s19
    %p131 = scmp.eq.s32.totalorder %s130, 0
    %s133 = sadd.s32 %s132, 1
    %s134 = scalar_select %p131, %s132, %s133
    %p137 = pneg %p131
    %p138 = scmp.eq.s32.totalorder %s12, 1
    %p139 = por %p137, %p138
    %p140 = scmp.ne.s32.totalorder %s132, %s135
    %p141 = scmp.eq.s32.totalorder %s12, 0
    %p142 = por %p140, %p141
    %p143 = scmp.ne.s32.totalorder %s132, %s135
    %p144 = scmp.eq.s32.totalorder %s17, 1
    %p145 = por %p143, %p144
    %p146 = scmp.ne.s32.totalorder %s135, %s136
    %p147 = scmp.eq.s32.totalorder %s17, 0
    %p148 = por %p146, %p147
    %p149 = scmp.ne.s32.totalorder %s135, %s136
    %p150 = scmp.eq.s32.totalorder %s18, 1
    %p151 = por %p149, %p150
    %p153 = scmp.ne.s32.totalorder %s136, %s152
    %p154 = scmp.eq.s32.totalorder %s18, 0
    %p155 = por %p153, %p154
    %p156 = scmp.le.s32.totalorder 1, %s12
    %p157 = scmp.lt.s32.totalorder %s12, 3
    %p158 = pnand %p156, %p157
    %p159 = pneg %p158
    // Predicated region
    $region9: #{down2_forward.1} parent=5 // pred_check
      _
    $region10: #{down2_forward.1} parent=5 // pred_check_branch
      %161 = sbr.rel (%p158) target = $region12
    $region11: #{down2_forward.1} parent=5 // pred_region
      %s162 = ssub.s32 %s12, 1
      // Predicated region
      $region13: #{down2_forward.1} parent=11 // pred_check
        %p163 = pneg %p33
      $region14: #{down2_forward.1} parent=11 // pred_check_branch
        %165 = sbr.rel (%p163) target = $region16
      $region15: #{down2_forward.1} parent=11 // pred_region
        _
      $region16: #{down2_forward.1} parent=11 // pred_fallthru
        _
      // Predicated region
      $region17: #{down2_forward.1} parent=11 // pred_check
        %p166 = pneg %p80
      $region18: #{down2_forward.1} parent=11 // pred_check_branch
        %168 = sbr.rel (%p166) target = $region20
      $region19: #{down2_forward.1} parent=11 // pred_region
        _
      $region20: #{down2_forward.1} parent=11 // pred_fallthru
        _
      // Predicated region
      $region21: #{down2_forward.1} parent=11 // pred_check
        %p169 = pneg %p101
      $region22: #{down2_forward.1} parent=11 // pred_check_branch
        %171 = sbr.rel (%p169) target = $region24
      $region23: #{down2_forward.1} parent=11 // pred_region
        _
      $region24: #{down2_forward.1} parent=11 // pred_fallthru
        _
      // Predicated region
      $region25: #{down2_forward.1} parent=11 // pred_check
        %p172 = pneg %p122
      $region26: #{down2_forward.1} parent=11 // pred_check_branch
        %174 = sbr.rel (%p172) target = $region28
      $region27: #{down2_forward.1} parent=11 // pred_region
        _
      $region28: #{down2_forward.1} parent=11 // pred_fallthru
        _
    $region12: #{down2_forward.1} parent=5 // pred_fallthru
      _
    %p175 = scmp.lt.s32.totalorder %s12, 2
    // Predicated region
    $region29: #{down2_forward.1} parent=5 // pred_check
      %p176 = pneg %p175
    $region30: #{down2_forward.1} parent=5 // pred_check_branch
      %178 = sbr.rel (%p176) target = $region32
    $region31: #{down2_forward.1} parent=5 // pred_region
      // Predicated region
      $region33: #{down2_forward.1} parent=31 // pred_check
        %p179 = pneg %p53
      $region34: #{down2_forward.1} parent=31 // pred_check_branch
        %181 = sbr.rel (%p179) target = $region36
      $region35: #{down2_forward.1} parent=31 // pred_region
        %p182 = scmp.lt.s32.totalorder %s12, 1
        %s183 = scalar_select %p182, %s12, 1
        %s184 = smul.addr %s183, 2
        %s185 = smul.addr %s184, 8
        %s186 = scalar_lea.vmem %s1, %s185
      $region36: #{down2_forward.1} parent=31 // pred_fallthru
        _
    $region32: #{down2_forward.1} parent=5 // pred_fallthru
      _
    %p187 = scmp.le.s32.totalorder 1, %s12
    %p188 = scmp.lt.s32.totalorder %s12, 3
    %p189 = pnand %p187, %p188
    %p190 = pneg %p189
    // Predicated region
    $region37: #{down2_forward.1} parent=5 // pred_check
      _
    $region38: #{down2_forward.1} parent=5 // pred_check_branch
      %192 = sbr.rel (%p189) target = $region40
    $region39: #{down2_forward.1} parent=5 // pred_region
      %s193 = ssub.s32 %s12, 1
      %p194 = pneg %p33
      %p195 = pneg %p30
      %p196 = scmp.lt.s32.totalorder %s17, 1
      %s197 = scalar_select %p196, %s17, 1
      %s198 = smul.addr %s197, 2
      %s199 = smul.addr %s198, 8
      %s200 = scalar_lea.vmem %s1, %s199
      %p201 = pneg %p59
      %p202 = pneg %p56
      %p203 = pneg %p80
      %p204 = pneg %p77
      %p205 = pneg %p101
      %p206 = pneg %p98
      %p207 = pneg %p122
      %p208 = pneg %p119
      %p209 = pneg %p148
      %p210 = pneg %p145
      %p211 = scmp.lt.s32.totalorder %s17, 1
      %s212 = scalar_select %p211, %s17, 1
      %s213 = smul.addr %s212, 8
      %s214 = scalar_lea.vmem %s5, %s213
      %p215 = scmp.lt.s32.totalorder %s17, 1
      %s216 = scalar_select %p215, %s17, 1
      %s217 = smul.addr %s216, 2
      %s218 = smul.addr %s217, 8
      %s219 = scalar_lea.vmem %s1, %s218
      %p220 = scmp.lt.s32.totalorder %s17, 1
      %s221 = scalar_select %p220, %s17, 1
      %s222 = smul.addr %s221, 8
      %s223 = scalar_lea.vmem %s5, %s222
      %s224 = sld [smem:[#allocation4]]
      %v225 = vlaneseq
      %v226 = vand.u32 %v225, 127
      %vm227 = vcmp.lt.s32.totalorder %v226, 0
      %v228 = vsub.s32 0, %v226
      %v229 = vsel %vm227, %v228, %v226
      %v230 = vmul.u32.u64.compose %v229, 3435973837
      %v231 = vextract.low.u32 %v230
      %v232 = vextract.high.u32 %v230
      %v233 = vshrl.u32 %v232, 3
      %v234 = vmul.u32 %v233, 10
      %v235 = vsub.s32 %v229, %v234
      %v236 = vsub.s32 0, %v235
      %v237 = vsel %vm227, %v236, %v235
      %vm238 = vcmp.ne.s32.totalorder %v237, 0
      %vm239 = vcmp.lt.s32.totalorder %v237, 0
      %vm240 = vmand %vm239, %vm238
      %v241 = vadd.s32 %v237, 10
      %v242 = vsel %vm240, %v241, %v237
      %vm243 = vcmp.lt.s32.totalorder %v242, 8
      %vm244 = vcmask 89088
      %245 = vst.msk [vmem:[#allocation2] sm:$0xff] %vm244, 0.0
      %246 = vst.msk [vmem:[#allocation2 + $0x8] sm:$0xff] %vm244, 0.0
      %247 = vst.msk [vmem:[#allocation2 + $0x10] sm:$0xff] %vm244, 0.0
      %248 = vst.msk [vmem:[#allocation2 + $0x18] sm:$0xff] %vm244, 0.0
      %249 = vst.msk [vmem:[#allocation2 + $0x20] sm:$0xff] %vm244, 0.0
      %250 = vst.msk [vmem:[#allocation2 + $0x28] sm:$0xff] %vm244, 0.0
      %251 = vst.msk [vmem:[#allocation2 + $0x30] sm:$0xff] %vm244, 0.0
      %252 = vst.msk [vmem:[#allocation2 + $0x38] sm:$0xff] %vm244, 0.0
      %253 = vst.msk [vmem:[#allocation2 + $0x40] sm:$0xff] %vm244, 0.0
      %254 = vst.msk [vmem:[#allocation2 + $0x48] sm:$0xff] %vm244, 0.0
      %255 = vst.msk [vmem:[#allocation2 + $0x50] sm:$0xff] %vm244, 0.0
      %256 = vst.msk [vmem:[#allocation2 + $0x58] sm:$0xff] %vm244, 0.0
      %257 = vst.msk [vmem:[#allocation2 + $0x60] sm:$0xff] %vm244, 0.0
      %258 = vst.msk [vmem:[#allocation2 + $0x68] sm:$0xff] %vm244, 0.0
      %259 = vst.msk [vmem:[#allocation2 + $0x70] sm:$0xff] %vm244, 0.0
      %260 = vst.msk [vmem:[#allocation2 + $0x78] sm:$0xff] %vm244, 0.0
      %261 = vst.msk [vmem:[#allocation3] sm:$0xff] %vm244, 0.0
      %262 = vst.msk [vmem:[#allocation3 + $0x8] sm:$0xff] %vm244, 0.0
      %263 = vst.msk [vmem:[#allocation3 + $0x10] sm:$0xff] %vm244, 0.0
      %264 = vst.msk [vmem:[#allocation3 + $0x18] sm:$0xff] %vm244, 0.0
      %vm265 = vcmask 818896
      %266 = vst.msk [vmem:[#allocation3] sm:$0xff] %vm265, 0.0
      %267 = vst.msk [vmem:[#allocation3 + $0x8] sm:$0xff] %vm265, 0.0
      %268 = vst.msk [vmem:[#allocation3 + $0x10] sm:$0xff] %vm265, 0.0
      %269 = vst.msk [vmem:[#allocation3 + $0x18] sm:$0xff] %vm265, 0.0
      %v270 = vld [vmem:[%s2] sm:$0xff]
      %v271 = vld [vmem:[%s2 + $0x8] sm:$0xff]
      %v272 = vld [vmem:[%s2 + $0x10] sm:$0xff]
      %v273 = vld [vmem:[%s2 + $0x18] sm:$0xff]
      %v274 = vld [vmem:[%s219] sm:$0xf]
      %v275 = vld [vmem:[%s219 + $0x4] sm:$0xf]
      %v276 = vld [vmem:[%s219 + $0x8] sm:$0xf]
      %v277 = vld [vmem:[%s219 + $0xc] sm:$0xf]
      %v279 = vrot.slane %v275, 4
      %282 = vrot.lane.b32.xlu0 %v274, 127
      %v283 = vpop.permute.xlu0 %282
      %v286 = vrot.slane %v276, 4
      %288 = vrot.lane.b32.xlu0 %v286, 127
      %v289 = vpop.permute.xlu0 %288
      %291 = vrot.lane.b32.xlu0 %v274, 118
      %v292 = vpop.permute.xlu0 %291
      %294 = vrot.lane.b32.xlu0 %v279, 118
      %v295 = vpop.permute.xlu0 %294
      %297 = vrot.lane.b32.xlu0 %v274, 117
      %v298 = vpop.permute.xlu0 %297
      %vm299 = vcmask 1043456
      %v300 = vsel %vm299, %v274, %v279
      %v301 = vsel %vm299, %v283, %v286
      %v302 = vsel %vm299, %v277, %v289
      %v303 = vsel %vm299, %v292, %v295
      %vm304 = vcmask 293888
      %v306 = vsel %vm304, %v270, 0
      %v309 = vsel %vm304, %v271, 0
      %v312 = vsel %vm304, %v272, 0
      %v315 = vsel %vm304, %v273, 0
      %v317 = vsel %vm299, %v298, 0
      %319 = vmatprep.subr.mxu0 0.0
      %320 = vmatpush1.msra.mxu0 %v300
      %321 = vmatprep.subr.mxu0 0.0
      %322 = vmatpush1.msra.mxu0 %v301
      %323 = vmatprep.subr.mxu0 0.0
      %324 = vmatpush1.msra.mxu0 %v302
      %325 = vmatprep.subr.mxu0 0.0
      %326 = vmatpush1.msra.mxu0 %v303
      %327 = vmatprep.subr.mxu0 0.0
      %328 = vmatpush1.msra.mxu0 %v317
      %329 = vmatprep.subr.mxu0 0.0
      %330 = vmatpush1.msra.mxu0 0.0
      %331 = vmatprep.subr.mxu0 0.0
      %332 = vmatpush1.msra.mxu0 0.0
      %333 = vmatprep.subr.mxu0 0.0
      %334 = vmatpush1.msra.mxu0 0.0
      %335 = vmatprep.subr.mxu0 0.0
      %336 = vmatpush1.msra.mxu0 0.0
      %337 = vmatprep.subr.mxu0 0.0
      %338 = vmatpush1.msra.mxu0 0.0
      %339 = vmatprep.subr.mxu0 0.0
      %340 = vmatpush1.msra.mxu0 0.0
      %341 = vmatprep.subr.mxu0 0.0
      %342 = vmatpush1.msra.mxu0 0.0
      %343 = vmatprep.subr.mxu0 0.0
      %344 = vmatpush1.msra.mxu0 0.0
      %345 = vmatprep.subr.mxu0 0.0
      %346 = vmatpush1.msra.mxu0 0.0
      %347 = vmatprep.subr.mxu0 0.0
      %348 = vmatpush1.msra.mxu0 0.0
      %349 = vmatprep.subr.mxu0 0.0
      %350 = vmatpush1.msra.mxu0 0.0
      %351 = vmatprep.subr.mxu0 0.0
      %352 = vmatpush1.msra.mxu0 0.0
      %353 = vmatprep.subr.mxu0 0.0
      %354 = vmatpush1.msra.mxu0 0.0
      %355 = vmatprep.subr.mxu0 0.0
      %356 = vmatpush1.msra.mxu0 0.0
      %357 = vmatprep.subr.mxu0 0.0
      %358 = vmatpush1.msra.mxu0 0.0
      %359 = vmatprep.subr.mxu0 0.0
      %360 = vmatpush1.msra.mxu0 0.0
      %361 = vmatprep.subr.mxu0 0.0
      %362 = vmatpush1.msra.mxu0 0.0
      %363 = vmatprep.subr.mxu0 0.0
      %364 = vmatpush1.msra.mxu0 0.0
      %365 = vmatprep.subr.mxu0 0.0
      %366 = vmatpush1.msra.mxu0 0.0
      %367 = vmatprep.subr.mxu0 0.0
      %368 = vmatpush1.msra.mxu0 0.0
      %369 = vmatprep.subr.mxu0 0.0
      %370 = vmatpush1.msra.mxu0 0.0
      %371 = vmatprep.subr.mxu0 0.0
      %372 = vmatpush1.msra.mxu0 0.0
      %373 = vmatprep.subr.mxu0 0.0
      %374 = vmatpush1.msra.mxu0 0.0
      %375 = vmatprep.subr.mxu0 0.0
      %376 = vmatpush1.msra.mxu0 0.0
      %377 = vmatprep.subr.mxu0 0.0
      %378 = vmatpush1.msra.mxu0 0.0
      %379 = vmatprep.subr.mxu0 0.0
      %380 = vmatpush1.msra.mxu0 0.0
      %381 = vmatprep.subr.mxu0 0.0
      %382 = vmatpush1.msra.mxu0 0.0
      %383 = vmatprep.mubr.f32.mxu0 0.0
      %384 = vmatmul.mubr.f32.gmra.mrb[0].mxu0 %v306
      %v385 = vpop.f32.mrb[0].mxu0
      %v386 = vadd.f32 0.0, %v385
      %v387 = vpop.f32.mrb[0].mxu0
      %388 = vmatprep.mubr.f32.mxu0 0.0
      %389 = vmatmul.mubr.f32.gmra.mrb[0].mxu0 %v309
      %v390 = vpop.f32.mrb[0].mxu0
      %v391 = vadd.f32 0.0, %v390
      %v392 = vpop.f32.mrb[0].mxu0
      %393 = vmatprep.mubr.f32.mxu0 0.0
      %394 = vmatmul.mubr.f32.gmra.mrb[0].mxu0 %v312
      %v395 = vpop.f32.mrb[0].mxu0
      %v396 = vadd.f32 0.0, %v395
      %v397 = vpop.f32.mrb[0].mxu0
      %398 = vmatprep.mubr.f32.mxu0 0.0
      %399 = vmatmul.mubr.f32.gmra.mrb[0].mxu0 %v315
      %v400 = vpop.f32.mrb[0].mxu0
      %v401 = vadd.f32 0.0, %v400
      %v402 = vpop.f32.mrb[0].mxu0
      %403 = vdwg.mxu0
      %vm404 = vcmp.ge.f32.partialorder %v386, 0.0
      %vm405 = vcmp.ge.f32.partialorder %v391, 0.0
      %vm406 = vcmp.ge.f32.partialorder %v396, 0.0
      %vm407 = vcmp.ge.f32.partialorder %v401, 0.0
      %v408 = vstv %s224
      %v409 = vmul.f32 %v408, %v386
      %v410 = vmul.f32 %v408, %v391
      %v411 = vmul.f32 %v408, %v396
      %v412 = vmul.f32 %v408, %v401
      %v413 = vsel %vm404, %v386, %v409
      %v414 = vsel %vm405, %v391, %v410
      %v415 = vsel %vm406, %v396, %v411
      %v416 = vsel %vm407, %v401, %v412
      %v417 = vsel %vm243, 1, 0
      %vm418 = vcmp.eq.s32.totalorder %v417, 1
      %v419 = vsel %vm418, %v413, 0.0
      %v420 = vsel %vm418, %v414, 0.0
      %v421 = vsel %vm418, %v415, 0.0
      %v422 = vsel %vm418, %v416, 0.0
      %427 = vrot.lane.b32.xlu0 %v419, 11
      %v428 = vpop.permute.xlu0 %427
      %429 = vrot.lane.b32.xlu0 %v420, 11
      %v430 = vpop.permute.xlu0 %429
      %431 = vrot.lane.b32.xlu0 %v421, 11
      %v432 = vpop.permute.xlu0 %431
      %433 = vrot.lane.b32.xlu0 %v422, 11
      %v434 = vpop.permute.xlu0 %433
      %vm439 = vcmask 744536
      %440 = vst.msk [vmem:[#allocation2] sm:$0xff] %vm439, %v428
      %441 = vst.msk [vmem:[#allocation2 + $0x8] sm:$0xff] %vm439, %v430
      %442 = vst.msk [vmem:[#allocation2 + $0x10] sm:$0xff] %vm439, %v432
      %443 = vst.msk [vmem:[#allocation2 + $0x18] sm:$0xff] %vm439, %v434
      %v444 = vld [vmem:[%s219 + $0x4] sm:$0xf]
      %v445 = vld [vmem:[%s219] sm:$0xf]
      %v446 = vld [vmem:[%s219 + $0xc] sm:$0xf]
      %v447 = vld [vmem:[%s219 + $0x8] sm:$0xf]
      %v449 = vrot.slane %v445, 4
      %450 = vrot.lane.b32.xlu0 %v449, 127
      %v451 = vpop.permute.xlu0 %450
      %454 = vrot.lane.b32.xlu0 %v444, 127
      %v455 = vpop.permute.xlu0 %454
      %v458 = vrot.slane %v446, 4
      %461 = vrot.lane.b32.xlu0 %v447, 127
      %v462 = vpop.permute.xlu0 %461
      %464 = vrot.lane.b32.xlu0 %v458, 127
      %v465 = vpop.permute.xlu0 %464
      %467 = vrot.lane.b32.xlu0 %v444, 118
      %v468 = vpop.permute.xlu0 %467
      %470 = vrot.lane.b32.xlu0 %v449, 117
      %v471 = vpop.permute.xlu0 %470
      %473 = vrot.lane.b32.xlu0 %v444, 117
      %v474 = vpop.permute.xlu0 %473
      %v475 = vsel %vm299, %v444, %v451
      %v476 = vsel %vm299, %v455, %v458
      %v477 = vsel %vm299, %v462, %v465
      %v478 = vsel %vm299, %v468, %v471
      %v479 = vsel %vm299, %v474, 0
      %481 = vmatprep.subr.mxu0 0.0
      %482 = vmatpush1.msra.mxu0 %v475
      %483 = vmatprep.subr.mxu0 0.0
      %484 = vmatpush1.msra.mxu0 %v476
      %485 = vmatprep.subr.mxu0 0.0
      %486 = vmatpush1.msra.mxu0 %v477
      %487 = vmatprep.subr.mxu0 0.0
      %488 = vmatpush1.msra.mxu0 %v478
      %489 = vmatprep.subr.mxu0 0.0
      %490 = vmatpush1.msra.mxu0 %v479
      %491 = vmatprep.subr.mxu0 0.0
      %492 = vmatpush1.msra.mxu0 0.0
      %493 = vmatprep.subr.mxu0 0.0
      %494 = vmatpush1.msra.mxu0 0.0
      %495 = vmatprep.subr.mxu0 0.0
      %496 = vmatpush1.msra.mxu0 0.0
      %497 = vmatprep.subr.mxu0 0.0
      %498 = vmatpush1.msra.mxu0 0.0
      %499 = vmatprep.subr.mxu0 0.0
      %500 = vmatpush1.msra.mxu0 0.0
      %501 = vmatprep.subr.mxu0 0.0
      %502 = vmatpush1.msra.mxu0 0.0
      %503 = vmatprep.subr.mxu0 0.0
      %504 = vmatpush1.msra.mxu0 0.0
      %505 = vmatprep.subr.mxu0 0.0
      %506 = vmatpush1.msra.mxu0 0.0
      %507 = vmatprep.subr.mxu0 0.0
      %508 = vmatpush1.msra.mxu0 0.0
      %509 = vmatprep.subr.mxu0 0.0
      %510 = vmatpush1.msra.mxu0 0.0
      %511 = vmatprep.subr.mxu0 0.0
      %512 = vmatpush1.msra.mxu0 0.0
      %513 = vmatprep.subr.mxu0 0.0
      %514 = vmatpush1.msra.mxu0 0.0
      %515 = vmatprep.subr.mxu0 0.0
      %516 = vmatpush1.msra.mxu0 0.0
      %517 = vmatprep.subr.mxu0 0.0
      %518 = vmatpush1.msra.mxu0 0.0
      %519 = vmatprep.subr.mxu0 0.0
      %520 = vmatpush1.msra.mxu0 0.0
      %521 = vmatprep.subr.mxu0 0.0
      %522 = vmatpush1.msra.mxu0 0.0
      %523 = vmatprep.subr.mxu0 0.0
      %524 = vmatpush1.msra.mxu0 0.0
      %525 = vmatprep.subr.mxu0 0.0
      %526 = vmatpush1.msra.mxu0 0.0
      %527 = vmatprep.subr.mxu0 0.0
      %528 = vmatpush1.msra.mxu0 0.0
      %529 = vmatprep.subr.mxu0 0.0
      %530 = vmatpush1.msra.mxu0 0.0
      %531 = vmatprep.subr.mxu0 0.0
      %532 = vmatpush1.msra.mxu0 0.0
      %533 = vmatprep.subr.mxu0 0.0
      %534 = vmatpush1.msra.mxu0 0.0
      %535 = vmatprep.subr.mxu0 0.0
      %536 = vmatpush1.msra.mxu0 0.0
      %537 = vmatprep.subr.mxu0 0.0
      %538 = vmatpush1.msra.mxu0 0.0
      %539 = vmatprep.subr.mxu0 0.0
      %540 = vmatpush1.msra.mxu0 0.0
      %541 = vmatprep.subr.mxu0 0.0
      %542 = vmatpush1.msra.mxu0 0.0
      %543 = vmatprep.subr.mxu0 0.0
      %544 = vmatpush1.msra.mxu0 0.0
      %545 = vmatprep.mubr.f32.mxu0 0.0
      %546 = vmatmul.mubr.f32.gmra.mrb[0].mxu0 %v306
      %v547 = vpop.f32.mrb[0].mxu0
      %v548 = vadd.f32 0.0, %v547
      %v549 = vpop.f32.mrb[0].mxu0
      %550 = vmatprep.mubr.f32.mxu0 0.0
      %551 = vmatmul.mubr.f32.gmra.mrb[0].mxu0 %v309
      %v552 = vpop.f32.mrb[0].mxu0
      %v553 = vadd.f32 0.0, %v552
      %v554 = vpop.f32.mrb[0].mxu0
      %555 = vmatprep.mubr.f32.mxu0 0.0
      %556 = vmatmul.mubr.f32.gmra.mrb[0].mxu0 %v312
      %v557 = vpop.f32.mrb[0].mxu0
      %v558 = vadd.f32 0.0, %v557
      %v559 = vpop.f32.mrb[0].mxu0
      %560 = vmatprep.mubr.f32.mxu0 0.0
      %561 = vmatmul.mubr.f32.gmra.mrb[0].mxu0 %v315
      %v562 = vpop.f32.mrb[0].mxu0
      %v563 = vadd.f32 0.0, %v562
      %v564 = vpop.f32.mrb[0].mxu0
      %565 = vdwg.mxu0
      %vm566 = vcmp.ge.f32.partialorder %v548, 0.0
      %vm567 = vcmp.ge.f32.partialorder %v553, 0.0
      %vm568 = vcmp.ge.f32.partialorder %v558, 0.0
      %vm569 = vcmp.ge.f32.partialorder %v563, 0.0
      %v570 = vmul.f32 %v408, %v548
      %v571 = vmul.f32 %v408, %v553
      %v572 = vmul.f32 %v408, %v558
      %v573 = vmul.f32 %v408, %v563
      %v574 = vsel %vm566, %v548, %v570
      %v575 = vsel %vm567, %v553, %v571
      %v576 = vsel %vm568, %v558, %v572
      %v577 = vsel %vm569, %v563, %v573
      %v578 = vsel %vm418, %v574, 0.0
      %v579 = vsel %vm418, %v575, 0.0
      %v580 = vsel %vm418, %v576, 0.0
      %v581 = vsel %vm418, %v577, 0.0
      %586 = vrot.lane.b32.xlu0 %v578, 11
      %v587 = vpop.permute.xlu0 %586
      %588 = vrot.lane.b32.xlu0 %v579, 11
      %v589 = vpop.permute.xlu0 %588
      %590 = vrot.lane.b32.xlu0 %v580, 11
      %v591 = vpop.permute.xlu0 %590
      %592 = vrot.lane.b32.xlu0 %v581, 11
      %v593 = vpop.permute.xlu0 %592
      %s598 = scalar_lea.vmem [#allocation2], 32
      %599 = vst.msk [vmem:[%s598] sm:$0xff] %vm439, %v587
      %600 = vst.msk [vmem:[%s598 + $0x8] sm:$0xff] %vm439, %v589
      %601 = vst.msk [vmem:[%s598 + $0x10] sm:$0xff] %vm439, %v591
      %602 = vst.msk [vmem:[%s598 + $0x18] sm:$0xff] %vm439, %v593
      %v603 = vld [vmem:[%s219 + $0x8] sm:$0xf]
      %v604 = vld [vmem:[%s219 + $0xc] sm:$0xf]
      %v605 = vld [vmem:[%s219] sm:$0xf]
      %v606 = vld [vmem:[%s219 + $0x4] sm:$0xf]
      %v608 = vrot.slane %v604, 4
      %611 = vrot.lane.b32.xlu0 %v603, 127
      %v612 = vpop.permute.xlu0 %611
      %v615 = vrot.slane %v605, 4
      %616 = vrot.lane.b32.xlu0 %v615, 118
      %v617 = vpop.permute.xlu0 %616
      %620 = vrot.lane.b32.xlu0 %v606, 118
      %v621 = vpop.permute.xlu0 %620
      %623 = vrot.lane.b32.xlu0 %v615, 117
      %v624 = vpop.permute.xlu0 %623
      %626 = vrot.lane.b32.xlu0 %v603, 118
      %v627 = vpop.permute.xlu0 %626
      %629 = vrot.lane.b32.xlu0 %v608, 118
      %v630 = vpop.permute.xlu0 %629
      %632 = vrot.lane.b32.xlu0 %v603, 117
      %v633 = vpop.permute.xlu0 %632
      %v634 = vsel %vm299, %v603, %v608
      %v635 = vsel %vm299, %v612, %v617
      %v636 = vsel %vm299, %v621, %v624
      %v637 = vsel %vm299, %v627, %v630
      %v638 = vsel %vm299, %v633, 0
      %640 = vmatprep.subr.mxu0 0.0
      %641 = vmatpush1.msra.mxu0 %v634
      %642 = vmatprep.subr.mxu0 0.0
      %643 = vmatpush1.msra.mxu0 %v635
      %644 = vmatprep.subr.mxu0 0.0
      %645 = vmatpush1.msra.mxu0 %v636
      %646 = vmatprep.subr.mxu0 0.0
      %647 = vmatpush1.msra.mxu0 %v637
      %648 = vmatprep.subr.mxu0 0.0
      %649 = vmatpush1.msra.mxu0 %v638
      %650 = vmatprep.subr.mxu0 0.0
      %651 = vmatpush1.msra.mxu0 0.0
      %652 = vmatprep.subr.mxu0 0.0
      %653 = vmatpush1.msra.mxu0 0.0
      %654 = vmatprep.subr.mxu0 0.0
      %655 = vmatpush1.msra.mxu0 0.0
      %656 = vmatprep.subr.mxu0 0.0
      %657 = vmatpush1.msra.mxu0 0.0
      %658 = vmatprep.subr.mxu0 0.0
      %659 = vmatpush1.msra.mxu0 0.0
      %660 = vmatprep.subr.mxu0 0.0
      %661 = vmatpush1.msra.mxu0 0.0
      %662 = vmatprep.subr.mxu0 0.0
      %663 = vmatpush1.msra.mxu0 0.0
      %664 = vmatprep.subr.mxu0 0.0
      %665 = vmatpush1.msra.mxu0 0.0
      %666 = vmatprep.subr.mxu0 0.0
      %667 = vmatpush1.msra.mxu0 0.0
      %668 = vmatprep.subr.mxu0 0.0
      %669 = vmatpush1.msra.mxu0 0.0
      %670 = vmatprep.subr.mxu0 0.0
      %671 = vmatpush1.msra.mxu0 0.0
      %672 = vmatprep.subr.mxu0 0.0
      %673 = vmatpush1.msra.mxu0 0.0
      %674 = vmatprep.subr.mxu0 0.0
      %675 = vmatpush1.msra.mxu0 0.0
      %676 = vmatprep.subr.mxu0 0.0
      %677 = vmatpush1.msra.mxu0 0.0
      %678 = vmatprep.subr.mxu0 0.0
      %679 = vmatpush1.msra.mxu0 0.0
      %680 = vmatprep.subr.mxu0 0.0
      %681 = vmatpush1.msra.mxu0 0.0
      %682 = vmatprep.subr.mxu0 0.0
      %683 = vmatpush1.msra.mxu0 0.0
      %684 = vmatprep.subr.mxu0 0.0
      %685 = vmatpush1.msra.mxu0 0.0
      %686 = vmatprep.subr.mxu0 0.0
      %687 = vmatpush1.msra.mxu0 0.0
      %688 = vmatprep.subr.mxu0 0.0
      %689 = vmatpush1.msra.mxu0 0.0
      %690 = vmatprep.subr.mxu0 0.0
      %691 = vmatpush1.msra.mxu0 0.0
      %692 = vmatprep.subr.mxu0 0.0
      %693 = vmatpush1.msra.mxu0 0.0
      %694 = vmatprep.subr.mxu0 0.0
      %695 = vmatpush1.msra.mxu0 0.0
      %696 = vmatprep.subr.mxu0 0.0
      %697 = vmatpush1.msra.mxu0 0.0
      %698 = vmatprep.subr.mxu0 0.0
      %699 = vmatpush1.msra.mxu0 0.0
      %700 = vmatprep.subr.mxu0 0.0
      %701 = vmatpush1.msra.mxu0 0.0
      %702 = vmatprep.subr.mxu0 0.0
      %703 = vmatpush1.msra.mxu0 0.0
      %704 = vmatprep.mubr.f32.mxu0 0.0
      %705 = vmatmul.mubr.f32.gmra.mrb[0].mxu0 %v306
      %v706 = vpop.f32.mrb[0].mxu0
      %v707 = vadd.f32 0.0, %v706
      %v708 = vpop.f32.mrb[0].mxu0
      %709 = vmatprep.mubr.f32.mxu0 0.0
      %710 = vmatmul.mubr.f32.gmra.mrb[0].mxu0 %v309
      %v711 = vpop.f32.mrb[0].mxu0
      %v712 = vadd.f32 0.0, %v711
      %v713 = vpop.f32.mrb[0].mxu0
      %714 = vmatprep.mubr.f32.mxu0 0.0
      %715 = vmatmul.mubr.f32.gmra.mrb[0].mxu0 %v312
      %v716 = vpop.f32.mrb[0].mxu0
      %v717 = vadd.f32 0.0, %v716
      %v718 = vpop.f32.mrb[0].mxu0
      %719 = vmatprep.mubr.f32.mxu0 0.0
      %720 = vmatmul.mubr.f32.gmra.mrb[0].mxu0 %v315
      %v721 = vpop.f32.mrb[0].mxu0
      %v722 = vadd.f32 0.0, %v721
      %v723 = vpop.f32.mrb[0].mxu0
      %724 = vdwg.mxu0
      %vm725 = vcmp.ge.f32.partialorder %v707, 0.0
      %vm726 = vcmp.ge.f32.partialorder %v712, 0.0
      %vm727 = vcmp.ge.f32.partialorder %v717, 0.0
      %vm728 = vcmp.ge.f32.partialorder %v722, 0.0
      %v729 = vmul.f32 %v408, %v707
      %v730 = vmul.f32 %v408, %v712
      %v731 = vmul.f32 %v408, %v717
      %v732 = vmul.f32 %v408, %v722
      %v733 = vsel %vm725, %v707, %v729
      %v734 = vsel %vm726, %v712, %v730
      %v735 = vsel %vm727, %v717, %v731
      %v736 = vsel %vm728, %v722, %v732
      %v737 = vsel %vm418, %v733, 0.0
      %v738 = vsel %vm418, %v734, 0.0
      %v739 = vsel %vm418, %v735, 0.0
      %v740 = vsel %vm418, %v736, 0.0
      %745 = vrot.lane.b32.xlu0 %v737, 11
      %v746 = vpop.permute.xlu0 %745
      %747 = vrot.lane.b32.xlu0 %v738, 11
      %v748 = vpop.permute.xlu0 %747
      %749 = vrot.lane.b32.xlu0 %v739, 11
      %v750 = vpop.permute.xlu0 %749
      %751 = vrot.lane.b32.xlu0 %v740, 11
      %v752 = vpop.permute.xlu0 %751
      %s757 = scalar_lea.vmem [#allocation2], 64
      %758 = vst.msk [vmem:[%s757] sm:$0xff] %vm439, %v746
      %759 = vst.msk [vmem:[%s757 + $0x8] sm:$0xff] %vm439, %v748
      %760 = vst.msk [vmem:[%s757 + $0x10] sm:$0xff] %vm439, %v750
      %761 = vst.msk [vmem:[%s757 + $0x18] sm:$0xff] %vm439, %v752
      %v762 = vld [vmem:[%s219 + $0xc] sm:$0xf]
      %v763 = vld [vmem:[%s219 + $0x8] sm:$0xf]
      %v764 = vld [vmem:[%s219 + $0x4] sm:$0xf]
      %v765 = vld [vmem:[%s219] sm:$0xf]
      %v767 = vrot.slane %v763, 4
      %768 = vrot.lane.b32.xlu0 %v767, 127
      %v769 = vpop.permute.xlu0 %768
      %772 = vrot.lane.b32.xlu0 %v762, 127
      %v773 = vpop.permute.xlu0 %772
      %v776 = vrot.slane %v764, 4
      %777 = vrot.lane.b32.xlu0 %v776, 118
      %v778 = vpop.permute.xlu0 %777
      %781 = vrot.lane.b32.xlu0 %v765, 117
      %v782 = vpop.permute.xlu0 %781
      %784 = vrot.lane.b32.xlu0 %v776, 117
      %v785 = vpop.permute.xlu0 %784
      %787 = vrot.lane.b32.xlu0 %v762, 118
      %v788 = vpop.permute.xlu0 %787
      %790 = vrot.lane.b32.xlu0 %v767, 117
      %v791 = vpop.permute.xlu0 %790
      %793 = vrot.lane.b32.xlu0 %v762, 117
      %v794 = vpop.permute.xlu0 %793
      %v795 = vsel %vm299, %v762, %v769
      %v796 = vsel %vm299, %v773, %v778
      %v797 = vsel %vm299, %v782, %v785
      %v798 = vsel %vm299, %v788, %v791
      %v799 = vsel %vm299, %v794, 0
      %801 = vmatprep.subr.mxu0 0.0
      %802 = vmatpush1.msra.mxu0 %v795
      %803 = vmatprep.subr.mxu0 0.0
      %804 = vmatpush1.msra.mxu0 %v796
      %805 = vmatprep.subr.mxu0 0.0
      %806 = vmatpush1.msra.mxu0 %v797
      %807 = vmatprep.subr.mxu0 0.0
      %808 = vmatpush1.msra.mxu0 %v798
      %809 = vmatprep.subr.mxu0 0.0
      %810 = vmatpush1.msra.mxu0 %v799
      %811 = vmatprep.subr.mxu0 0.0
      %812 = vmatpush1.msra.mxu0 0.0
      %813 = vmatprep.subr.mxu0 0.0
      %814 = vmatpush1.msra.mxu0 0.0
      %815 = vmatprep.subr.mxu0 0.0
      %816 = vmatpush1.msra.mxu0 0.0
      %817 = vmatprep.subr.mxu0 0.0
      %818 = vmatpush1.msra.mxu0 0.0
      %819 = vmatprep.subr.mxu0 0.0
      %820 = vmatpush1.msra.mxu0 0.0
      %821 = vmatprep.subr.mxu0 0.0
      %822 = vmatpush1.msra.mxu0 0.0
      %823 = vmatprep.subr.mxu0 0.0
      %824 = vmatpush1.msra.mxu0 0.0
      %825 = vmatprep.subr.mxu0 0.0
      %826 = vmatpush1.msra.mxu0 0.0
      %827 = vmatprep.subr.mxu0 0.0
      %828 = vmatpush1.msra.mxu0 0.0
      %829 = vmatprep.subr.mxu0 0.0
      %830 = vmatpush1.msra.mxu0 0.0
      %831 = vmatprep.subr.mxu0 0.0
      %832 = vmatpush1.msra.mxu0 0.0
      %833 = vmatprep.subr.mxu0 0.0
      %834 = vmatpush1.msra.mxu0 0.0
      %835 = vmatprep.subr.mxu0 0.0
      %836 = vmatpush1.msra.mxu0 0.0
      %837 = vmatprep.subr.mxu0 0.0
      %838 = vmatpush1.msra.mxu0 0.0
      %839 = vmatprep.subr.mxu0 0.0
      %840 = vmatpush1.msra.mxu0 0.0
      %841 = vmatprep.subr.mxu0 0.0
      %842 = vmatpush1.msra.mxu0 0.0
      %843 = vmatprep.subr.mxu0 0.0
      %844 = vmatpush1.msra.mxu0 0.0
      %845 = vmatprep.subr.mxu0 0.0
      %846 = vmatpush1.msra.mxu0 0.0
      %847 = vmatprep.subr.mxu0 0.0
      %848 = vmatpush1.msra.mxu0 0.0
      %849 = vmatprep.subr.mxu0 0.0
      %850 = vmatpush1.msra.mxu0 0.0
      %851 = vmatprep.subr.mxu0 0.0
      %852 = vmatpush1.msra.mxu0 0.0
      %853 = vmatprep.subr.mxu0 0.0
      %854 = vmatpush1.msra.mxu0 0.0
      %855 = vmatprep.subr.mxu0 0.0
      %856 = vmatpush1.msra.mxu0 0.0
      %857 = vmatprep.subr.mxu0 0.0
      %858 = vmatpush1.msra.mxu0 0.0
      %859 = vmatprep.subr.mxu0 0.0
      %860 = vmatpush1.msra.mxu0 0.0
      %861 = vmatprep.subr.mxu0 0.0
      %862 = vmatpush1.msra.mxu0 0.0
      %863 = vmatprep.subr.mxu0 0.0
      %864 = vmatpush1.msra.mxu0 0.0
      %865 = vmatprep.mubr.f32.mxu0 0.0
      %866 = vmatmul.mubr.f32.gmra.mrb[0].mxu0 %v306
      %v867 = vpop.f32.mrb[0].mxu0
      %v868 = vadd.f32 0.0, %v867
      %v869 = vpop.f32.mrb[0].mxu0
      %870 = vmatprep.mubr.f32.mxu0 0.0
      %871 = vmatmul.mubr.f32.gmra.mrb[0].mxu0 %v309
      %v872 = vpop.f32.mrb[0].mxu0
      %v873 = vadd.f32 0.0, %v872
      %v874 = vpop.f32.mrb[0].mxu0
      %875 = vmatprep.mubr.f32.mxu0 0.0
      %876 = vmatmul.mubr.f32.gmra.mrb[0].mxu0 %v312
      %v877 = vpop.f32.mrb[0].mxu0
      %v878 = vadd.f32 0.0, %v877
      %v879 = vpop.f32.mrb[0].mxu0
      %880 = vmatprep.mubr.f32.mxu0 0.0
      %881 = vmatmul.mubr.f32.gmra.mrb[0].mxu0 %v315
      %v882 = vpop.f32.mrb[0].mxu0
      %v883 = vadd.f32 0.0, %v882
      %v884 = vpop.f32.mrb[0].mxu0
      %885 = vdwg.mxu0
      %vm886 = vcmp.ge.f32.partialorder %v868, 0.0
      %vm887 = vcmp.ge.f32.partialorder %v873, 0.0
      %vm888 = vcmp.ge.f32.partialorder %v878, 0.0
      %vm889 = vcmp.ge.f32.partialorder %v883, 0.0
      %v890 = vmul.f32 %v408, %v868
      %v891 = vmul.f32 %v408, %v873
      %v892 = vmul.f32 %v408, %v878
      %v893 = vmul.f32 %v408, %v883
      %v894 = vsel %vm886, %v868, %v890
      %v895 = vsel %vm887, %v873, %v891
      %v896 = vsel %vm888, %v878, %v892
      %v897 = vsel %vm889, %v883, %v893
      %v898 = vsel %vm418, %v894, 0.0
      %v899 = vsel %vm418, %v895, 0.0
      %v900 = vsel %vm418, %v896, 0.0
      %v901 = vsel %vm418, %v897, 0.0
      %906 = vrot.lane.b32.xlu0 %v898, 11
      %v907 = vpop.permute.xlu0 %906
      %908 = vrot.lane.b32.xlu0 %v899, 11
      %v909 = vpop.permute.xlu0 %908
      %910 = vrot.lane.b32.xlu0 %v900, 11
      %v911 = vpop.permute.xlu0 %910
      %912 = vrot.lane.b32.xlu0 %v901, 11
      %v913 = vpop.permute.xlu0 %912
      %s918 = scalar_lea.vmem [#allocation2], 96
      %919 = vst.msk [vmem:[%s918] sm:$0xff] %vm439, %v907
      %920 = vst.msk [vmem:[%s918 + $0x8] sm:$0xff] %vm439, %v909
      %921 = vst.msk [vmem:[%s918 + $0x10] sm:$0xff] %vm439, %v911
      %922 = vst.msk [vmem:[%s918 + $0x18] sm:$0xff] %vm439, %v913
      %v923 = vld [vmem:[%s918] sm:$0xff]
      %v924 = vld [vmem:[%s918 + $0x8] sm:$0xff]
      %v925 = vld [vmem:[%s918 + $0x10] sm:$0xff]
      %v926 = vld [vmem:[%s918 + $0x18] sm:$0xff]
      %v927 = vld [vmem:[%s757] sm:$0xff]
      %v928 = vld [vmem:[%s757 + $0x8] sm:$0xff]
      %v929 = vld [vmem:[%s757 + $0x10] sm:$0xff]
      %v930 = vld [vmem:[%s757 + $0x18] sm:$0xff]
      %v931 = vld [vmem:[%s598] sm:$0xff]
      %v932 = vld [vmem:[%s598 + $0x8] sm:$0xff]
      %v933 = vld [vmem:[%s598 + $0x10] sm:$0xff]
      %v934 = vld [vmem:[%s598 + $0x18] sm:$0xff]
      %v935 = vld [vmem:[#allocation2] sm:$0xff]
      %v936 = vld [vmem:[#allocation2 + $0x8] sm:$0xff]
      %v937 = vld [vmem:[#allocation2 + $0x10] sm:$0xff]
      %v938 = vld [vmem:[#allocation2 + $0x18] sm:$0xff]
      %943 = vrot.lane.b32.xlu0 %v927, 127
      %v944 = vpop.permute.xlu0 %943
      %945 = vrot.lane.b32.xlu0 %v928, 127
      %v946 = vpop.permute.xlu0 %945
      %947 = vrot.lane.b32.xlu0 %v929, 127
      %v948 = vpop.permute.xlu0 %947
      %949 = vrot.lane.b32.xlu0 %v930, 127
      %v950 = vpop.permute.xlu0 %949
      %959 = vrot.lane.b32.xlu0 %v923, 127
      %v960 = vpop.permute.xlu0 %959
      %961 = vrot.lane.b32.xlu0 %v924, 127
      %v962 = vpop.permute.xlu0 %961
      %963 = vrot.lane.b32.xlu0 %v925, 127
      %v964 = vpop.permute.xlu0 %963
      %965 = vrot.lane.b32.xlu0 %v926, 127
      %v966 = vpop.permute.xlu0 %965
      %975 = vrot.lane.b32.xlu0 %v931, 118
      %v976 = vpop.permute.xlu0 %975
      %977 = vrot.lane.b32.xlu0 %v932, 118
      %v978 = vpop.permute.xlu0 %977
      %979 = vrot.lane.b32.xlu0 %v933, 118
      %v980 = vpop.permute.xlu0 %979
      %981 = vrot.lane.b32.xlu0 %v934, 118
      %v982 = vpop.permute.xlu0 %981
      %991 = vrot.lane.b32.xlu0 %v935, 117
      %v992 = vpop.permute.xlu0 %991
      %993 = vrot.lane.b32.xlu0 %v936, 117
      %v994 = vpop.permute.xlu0 %993
      %995 = vrot.lane.b32.xlu0 %v937, 117
      %v996 = vpop.permute.xlu0 %995
      %997 = vrot.lane.b32.xlu0 %v938, 117
      %v998 = vpop.permute.xlu0 %997
      %1003 = vrot.lane.b32.xlu0 %v931, 117
      %v1004 = vpop.permute.xlu0 %1003
      %1005 = vrot.lane.b32.xlu0 %v932, 117
      %v1006 = vpop.permute.xlu0 %1005
      %1007 = vrot.lane.b32.xlu0 %v933, 117
      %v1008 = vpop.permute.xlu0 %1007
      %1009 = vrot.lane.b32.xlu0 %v934, 117
      %v1010 = vpop.permute.xlu0 %1009
      %1015 = vrot.lane.b32.xlu0 %v923, 118
      %v1016 = vpop.permute.xlu0 %1015
      %1017 = vrot.lane.b32.xlu0 %v924, 118
      %v1018 = vpop.permute.xlu0 %1017
      %1019 = vrot.lane.b32.xlu0 %v925, 118
      %v1020 = vpop.permute.xlu0 %1019
      %1021 = vrot.lane.b32.xlu0 %v926, 118
      %v1022 = vpop.permute.xlu0 %1021
      %1027 = vrot.lane.b32.xlu0 %v927, 117
      %v1028 = vpop.permute.xlu0 %1027
      %1029 = vrot.lane.b32.xlu0 %v928, 117
      %v1030 = vpop.permute.xlu0 %1029
      %1031 = vrot.lane.b32.xlu0 %v929, 117
      %v1032 = vpop.permute.xlu0 %1031
      %1033 = vrot.lane.b32.xlu0 %v930, 117
      %v1034 = vpop.permute.xlu0 %1033
      %1039 = vrot.lane.b32.xlu0 %v923, 117
      %v1040 = vpop.permute.xlu0 %1039
      %1041 = vrot.lane.b32.xlu0 %v924, 117
      %v1042 = vpop.permute.xlu0 %1041
      %1043 = vrot.lane.b32.xlu0 %v925, 117
      %v1044 = vpop.permute.xlu0 %1043
      %1045 = vrot.lane.b32.xlu0 %v926, 117
      %v1046 = vpop.permute.xlu0 %1045
      %v1051 = vld [vmem:[%s3] sm:$0xff]
      %v1052 = vld [vmem:[%s3 + $0x8] sm:$0xff]
      %v1053 = vld [vmem:[%s3 + $0x10] sm:$0xff]
      %v1054 = vld [vmem:[%s3 + $0x18] sm:$0xff]
      %v1055 = vld [vmem:[%s3 + $0x20] sm:$0xff]
      %v1056 = vld [vmem:[%s3 + $0x28] sm:$0xff]
      %v1057 = vld [vmem:[%s3 + $0x30] sm:$0xff]
      %v1058 = vld [vmem:[%s3 + $0x38] sm:$0xff]
      %v1059 = vld [vmem:[%s3 + $0x40] sm:$0xff]
      %v1060 = vld [vmem:[%s3 + $0x48] sm:$0xff]
      %v1061 = vld [vmem:[%s3 + $0x50] sm:$0xff]
      %v1062 = vld [vmem:[%s3 + $0x58] sm:$0xff]
      %vm1063 = vcmask 261120
      %v1065 = vsel %vm1063, %v1053, 0
      %v1068 = vsel %vm1063, %v1056, 0
      %v1071 = vsel %vm1063, %v1059, 0
      %v1074 = vsel %vm1063, %v1062, 0
      %1076 = vmatprep.subr.mxu0 0.0
      %1077 = vmatpush1.msra.mxu0 %v923
      %1078 = vmatprep.subr.mxu0 0.0
      %1079 = vmatpush1.msra.mxu0 %v924
      %1080 = vmatprep.subr.mxu0 0.0
      %1081 = vmatpush1.msra.mxu0 %v925
      %1082 = vmatprep.subr.mxu0 0.0
      %1083 = vmatpush1.msra.mxu0 %v926
      %1084 = vmatprep.subr.mxu0 0.0
      %1085 = vmatpush1.msra.mxu0 %v944
      %1086 = vmatprep.subr.mxu0 0.0
      %1087 = vmatpush1.msra.mxu0 %v946
      %1088 = vmatprep.subr.mxu0 0.0
      %1089 = vmatpush1.msra.mxu0 %v948
      %1090 = vmatprep.subr.mxu0 0.0
      %1091 = vmatpush1.msra.mxu0 %v950
      %1092 = vmatprep.subr.mxu0 0.0
      %1093 = vmatpush1.msra.mxu0 %v960
      %1094 = vmatprep.subr.mxu0 0.0
      %1095 = vmatpush1.msra.mxu0 %v962
      %1096 = vmatprep.subr.mxu0 0.0
      %1097 = vmatpush1.msra.mxu0 %v964
      %1098 = vmatprep.subr.mxu0 0.0
      %1099 = vmatpush1.msra.mxu0 %v966
      %1100 = vmatprep.subr.mxu0 0.0
      %1101 = vmatpush1.msra.mxu0 %v976
      %1102 = vmatprep.subr.mxu0 0.0
      %1103 = vmatpush1.msra.mxu0 %v978
      %1104 = vmatprep.subr.mxu0 0.0
      %1105 = vmatpush1.msra.mxu0 %v980
      %1106 = vmatprep.subr.mxu0 0.0
      %1107 = vmatpush1.msra.mxu0 %v982
      %1108 = vmatprep.subr.mxu0 0.0
      %1109 = vmatpush1.msra.mxu0 %v992
      %1110 = vmatprep.subr.mxu0 0.0
      %1111 = vmatpush1.msra.mxu0 %v994
      %1112 = vmatprep.subr.mxu0 0.0
      %1113 = vmatpush1.msra.mxu0 %v996
      %1114 = vmatprep.subr.mxu0 0.0
      %1115 = vmatpush1.msra.mxu0 %v998
      %1116 = vmatprep.subr.mxu0 0.0
      %1117 = vmatpush1.msra.mxu0 %v1004
      %1118 = vmatprep.subr.mxu0 0.0
      %1119 = vmatpush1.msra.mxu0 %v1006
      %1120 = vmatprep.subr.mxu0 0.0
      %1121 = vmatpush1.msra.mxu0 %v1008
      %1122 = vmatprep.subr.mxu0 0.0
      %1123 = vmatpush1.msra.mxu0 %v1010
      %1124 = vmatprep.subr.mxu0 0.0
      %1125 = vmatpush1.msra.mxu0 %v1016
      %1126 = vmatprep.subr.mxu0 0.0
      %1127 = vmatpush1.msra.mxu0 %v1018
      %1128 = vmatprep.subr.mxu0 0.0
      %1129 = vmatpush1.msra.mxu0 %v1020
      %1130 = vmatprep.subr.mxu0 0.0
      %1131 = vmatpush1.msra.mxu0 %v1022
      %1132 = vmatprep.subr.mxu0 0.0
      %1133 = vmatpush1.msra.mxu0 %v1028
      %1134 = vmatprep.subr.mxu0 0.0
      %1135 = vmatpush1.msra.mxu0 %v1030
      %1136 = vmatprep.subr.mxu0 0.0
      %1137 = vmatpush1.msra.mxu0 %v1032
      %1138 = vmatprep.subr.mxu0 0.0
      %1139 = vmatpush1.msra.mxu0 %v1034
      %1140 = vmatprep.mubr.f32.mxu0 %v1052
      %1141 = vmatmul.mubr.f32.gmra.mrb[0].mxu0 %v1051
      %v1142 = vpop.f32.mrb[0].mxu0
      %v1143 = vadd.f32 0.0, %v1142
      %v1144 = vpop.f32.mrb[0].mxu0
      %1145 = vmatprep.mubr.f32.mxu0 %v1055
      %1146 = vmatmul.mubr.f32.gmra.mrb[0].mxu0 %v1054
      %v1147 = vpop.f32.mrb[0].mxu0
      %v1148 = vadd.f32 0.0, %v1147
      %v1149 = vpop.f32.mrb[0].mxu0
      %1150 = vmatprep.mubr.f32.mxu0 %v1058
      %1151 = vmatmul.mubr.f32.gmra.mrb[0].mxu0 %v1057
      %v1152 = vpop.f32.mrb[0].mxu0
      %v1153 = vadd.f32 0.0, %v1152
      %v1154 = vpop.f32.mrb[0].mxu0
      %1155 = vmatprep.mubr.f32.mxu0 %v1061
      %1156 = vmatmul.mubr.f32.gmra.mrb[0].mxu0 %v1060
      %v1157 = vpop.f32.mrb[0].mxu0
      %v1158 = vadd.f32 0.0, %v1157
      %v1159 = vpop.f32.mrb[0].mxu0
      %1160 = vdwg.mxu0
      %1161 = vmatprep.subr.mxu0 0.0
      %1162 = vmatpush1.msra.mxu0 %v1040
      %1163 = vmatprep.subr.mxu0 0.0
      %1164 = vmatpush1.msra.mxu0 %v1042
      %1165 = vmatprep.subr.mxu0 0.0
      %1166 = vmatpush1.msra.mxu0 %v1044
      %1167 = vmatprep.subr.mxu0 0.0
      %1168 = vmatpush1.msra.mxu0 %v1046
      %1169 = vmatprep.subr.mxu0 0.0
      %1170 = vmatpush1.msra.mxu0 0.0
      %1171 = vmatprep.subr.mxu0 0.0
      %1172 = vmatpush1.msra.mxu0 0.0
      %1173 = vmatprep.subr.mxu0 0.0
      %1174 = vmatpush1.msra.mxu0 0.0
      %1175 = vmatprep.subr.mxu0 0.0
      %1176 = vmatpush1.msra.mxu0 0.0
      %1177 = vmatprep.subr.mxu0 0.0
      %1178 = vmatpush1.msra.mxu0 0.0
      %1179 = vmatprep.subr.mxu0 0.0
      %1180 = vmatpush1.msra.mxu0 0.0
      %1181 = vmatprep.subr.mxu0 0.0
      %1182 = vmatpush1.msra.mxu0 0.0
      %1183 = vmatprep.subr.mxu0 0.0
      %1184 = vmatpush1.msra.mxu0 0.0
      %1185 = vmatprep.subr.mxu0 0.0
      %1186 = vmatpush1.msra.mxu0 0.0
      %1187 = vmatprep.subr.mxu0 0.0
      %1188 = vmatpush1.msra.mxu0 0.0
      %1189 = vmatprep.subr.mxu0 0.0
      %1190 = vmatpush1.msra.mxu0 0.0
      %1191 = vmatprep.subr.mxu0 0.0
      %1192 = vmatpush1.msra.mxu0 0.0
      %1193 = vmatprep.subr.mxu0 0.0
      %1194 = vmatpush1.msra.mxu0 0.0
      %1195 = vmatprep.subr.mxu0 0.0
      %1196 = vmatpush1.msra.mxu0 0.0
      %1197 = vmatprep.subr.mxu0 0.0
      %1198 = vmatpush1.msra.mxu0 0.0
      %1199 = vmatprep.subr.mxu0 0.0
      %1200 = vmatpush1.msra.mxu0 0.0
      %1201 = vmatprep.subr.mxu0 0.0
      %1202 = vmatpush1.msra.mxu0 0.0
      %1203 = vmatprep.subr.mxu0 0.0
      %1204 = vmatpush1.msra.mxu0 0.0
      %1205 = vmatprep.subr.mxu0 0.0
      %1206 = vmatpush1.msra.mxu0 0.0
      %1207 = vmatprep.subr.mxu0 0.0
      %1208 = vmatpush1.msra.mxu0 0.0
      %1209 = vmatprep.subr.mxu0 0.0
      %1210 = vmatpush1.msra.mxu0 0.0
      %1211 = vmatprep.subr.mxu0 0.0
      %1212 = vmatpush1.msra.mxu0 0.0
      %1213 = vmatprep.subr.mxu0 0.0
      %1214 = vmatpush1.msra.mxu0 0.0
      %1215 = vmatprep.subr.mxu0 0.0
      %1216 = vmatpush1.msra.mxu0 0.0
      %1217 = vmatprep.subr.mxu0 0.0
      %1218 = vmatpush1.msra.mxu0 0.0
      %1219 = vmatprep.subr.mxu0 0.0
      %1220 = vmatpush1.msra.mxu0 0.0
      %1221 = vmatprep.subr.mxu0 0.0
      %1222 = vmatpush1.msra.mxu0 0.0
      %1223 = vmatprep.subr.mxu0 0.0
      %1224 = vmatpush1.msra.mxu0 0.0
      %1225 = vmatprep.mubr.f32.mxu0 0.0
      %1226 = vmatmul.mubr.f32.gmra.mrb[0].mxu0 %v1065
      %v1227 = vpop.f32.mrb[0].mxu0
      %v1228 = vadd.f32 %v1143, %v1227
      %v1229 = vpop.f32.mrb[0].mxu0
      %1230 = vmatprep.mubr.f32.mxu0 0.0
      %1231 = vmatmul.mubr.f32.gmra.mrb[0].mxu0 %v1068
      %v1232 = vpop.f32.mrb[0].mxu0
      %v1233 = vadd.f32 %v1148, %v1232
      %v1234 = vpop.f32.mrb[0].mxu0
      %1235 = vmatprep.mubr.f32.mxu0 0.0
      %1236 = vmatmul.mubr.f32.gmra.mrb[0].mxu0 %v1071
      %v1237 = vpop.f32.mrb[0].mxu0
      %v1238 = vadd.f32 %v1153, %v1237
      %v1239 = vpop.f32.mrb[0].mxu0
      %1240 = vmatprep.mubr.f32.mxu0 0.0
      %1241 = vmatmul.mubr.f32.gmra.mrb[0].mxu0 %v1074
      %v1242 = vpop.f32.mrb[0].mxu0
      %v1243 = vadd.f32 %v1158, %v1242
      %v1244 = vpop.f32.mrb[0].mxu0
      %1245 = vdwg.mxu0
      %v1246 = vsel %vm418, %v1228, 0.0
      %v1247 = vsel %vm418, %v1233, 0.0
      %v1248 = vsel %vm418, %v1238, 0.0
      %v1249 = vsel %vm418, %v1243, 0.0
      %1254 = vrot.lane.b32.xlu0 %v1246, 11
      %v1255 = vpop.permute.xlu0 %1254
      %1256 = vrot.lane.b32.xlu0 %v1247, 11
      %v1257 = vpop.permute.xlu0 %1256
      %1258 = vrot.lane.b32.xlu0 %v1248, 11
      %v1259 = vpop.permute.xlu0 %1258
      %1260 = vrot.lane.b32.xlu0 %v1249, 11
      %v1261 = vpop.permute.xlu0 %1260
      %1266 = vst.msk [vmem:[#allocation3] sm:$0xff] %vm439, %v1255
      %1267 = vst.msk [vmem:[#allocation3 + $0x8] sm:$0xff] %vm439, %v1257
      %1268 = vst.msk [vmem:[#allocation3 + $0x10] sm:$0xff] %vm439, %v1259
      %1269 = vst.msk [vmem:[#allocation3 + $0x18] sm:$0xff] %vm439, %v1261
      %v1270 = vld [vmem:[#allocation3] sm:$0xff]
      %v1271 = vld [vmem:[#allocation3 + $0x8] sm:$0xff]
      %v1272 = vld [vmem:[#allocation3 + $0x10] sm:$0xff]
      %v1273 = vld [vmem:[#allocation3 + $0x18] sm:$0xff]
      %1278 = vrot.lane.b32.xlu0 %v1270, 127
      %v1279 = vpop.permute.xlu0 %1278
      %1280 = vrot.lane.b32.xlu0 %v1271, 127
      %v1281 = vpop.permute.xlu0 %1280
      %1282 = vrot.lane.b32.xlu0 %v1272, 127
      %v1283 = vpop.permute.xlu0 %1282
      %1284 = vrot.lane.b32.xlu0 %v1273, 127
      %v1285 = vpop.permute.xlu0 %1284
      %1290 = vrot.lane.b32.xlu0 %v1270, 126
      %v1291 = vpop.permute.xlu0 %1290
      %1292 = vrot.lane.b32.xlu0 %v1271, 126
      %v1293 = vpop.permute.xlu0 %1292
      %1294 = vrot.lane.b32.xlu0 %v1272, 126
      %v1295 = vpop.permute.xlu0 %1294
      %1296 = vrot.lane.b32.xlu0 %v1273, 126
      %v1297 = vpop.permute.xlu0 %1296
      %1302 = vrot.lane.b32.xlu0 %v1270, 118
      %v1303 = vpop.permute.xlu0 %1302
      %1304 = vrot.lane.b32.xlu0 %v1271, 118
      %v1305 = vpop.permute.xlu0 %1304
      %1306 = vrot.lane.b32.xlu0 %v1272, 118
      %v1307 = vpop.permute.xlu0 %1306
      %1308 = vrot.lane.b32.xlu0 %v1273, 118
      %v1309 = vpop.permute.xlu0 %1308
      %1314 = vrot.lane.b32.xlu0 %v1270, 117
      %v1315 = vpop.permute.xlu0 %1314
      %1316 = vrot.lane.b32.xlu0 %v1271, 117
      %v1317 = vpop.permute.xlu0 %1316
      %1318 = vrot.lane.b32.xlu0 %v1272, 117
      %v1319 = vpop.permute.xlu0 %1318
      %1320 = vrot.lane.b32.xlu0 %v1273, 117
      %v1321 = vpop.permute.xlu0 %1320
      %1326 = vrot.lane.b32.xlu0 %v1270, 116
      %v1327 = vpop.permute.xlu0 %1326
      %1328 = vrot.lane.b32.xlu0 %v1271, 116
      %v1329 = vpop.permute.xlu0 %1328
      %1330 = vrot.lane.b32.xlu0 %v1272, 116
      %v1331 = vpop.permute.xlu0 %1330
      %1332 = vrot.lane.b32.xlu0 %v1273, 116
      %v1333 = vpop.permute.xlu0 %1332
      %1338 = vrot.lane.b32.xlu0 %v1270, 108
      %v1339 = vpop.permute.xlu0 %1338
      %1340 = vrot.lane.b32.xlu0 %v1271, 108
      %v1341 = vpop.permute.xlu0 %1340
      %1342 = vrot.lane.b32.xlu0 %v1272, 108
      %v1343 = vpop.permute.xlu0 %1342
      %1344 = vrot.lane.b32.xlu0 %v1273, 108
      %v1345 = vpop.permute.xlu0 %1344
      %1350 = vrot.lane.b32.xlu0 %v1270, 107
      %v1351 = vpop.permute.xlu0 %1350
      %1352 = vrot.lane.b32.xlu0 %v1271, 107
      %v1353 = vpop.permute.xlu0 %1352
      %1354 = vrot.lane.b32.xlu0 %v1272, 107
      %v1355 = vpop.permute.xlu0 %1354
      %1356 = vrot.lane.b32.xlu0 %v1273, 107
      %v1357 = vpop.permute.xlu0 %1356
      %1362 = vrot.lane.b32.xlu0 %v1270, 106
      %v1363 = vpop.permute.xlu0 %1362
      %1364 = vrot.lane.b32.xlu0 %v1271, 106
      %v1365 = vpop.permute.xlu0 %1364
      %1366 = vrot.lane.b32.xlu0 %v1272, 106
      %v1367 = vpop.permute.xlu0 %1366
      %1368 = vrot.lane.b32.xlu0 %v1273, 106
      %v1369 = vpop.permute.xlu0 %1368
      %v1374 = vld [vmem:[%s4] sm:$0xff]
      %v1375 = vld [vmem:[%s4 + $0x8] sm:$0xff]
      %v1376 = vld [vmem:[%s4 + $0x10] sm:$0xff]
      %v1378 = vsel %vm1063, %v1376, 0
      %1380 = vmatprep.subr.mxu0 0.0
      %1381 = vmatpush1.msra.mxu0 %v1270
      %1382 = vmatprep.subr.mxu0 0.0
      %1383 = vmatpush1.msra.mxu0 %v1271
      %1384 = vmatprep.subr.mxu0 0.0
      %1385 = vmatpush1.msra.mxu0 %v1272
      %1386 = vmatprep.subr.mxu0 0.0
      %1387 = vmatpush1.msra.mxu0 %v1273
      %1388 = vmatprep.subr.mxu0 0.0
      %1389 = vmatpush1.msra.mxu0 %v1279
      %1390 = vmatprep.subr.mxu0 0.0
      %1391 = vmatpush1.msra.mxu0 %v1281
      %1392 = vmatprep.subr.mxu0 0.0
      %1393 = vmatpush1.msra.mxu0 %v1283
      %1394 = vmatprep.subr.mxu0 0.0
      %1395 = vmatpush1.msra.mxu0 %v1285
      %1396 = vmatprep.subr.mxu0 0.0
      %1397 = vmatpush1.msra.mxu0 %v1291
      %1398 = vmatprep.subr.mxu0 0.0
      %1399 = vmatpush1.msra.mxu0 %v1293
      %1400 = vmatprep.subr.mxu0 0.0
      %1401 = vmatpush1.msra.mxu0 %v1295
      %1402 = vmatprep.subr.mxu0 0.0
      %1403 = vmatpush1.msra.mxu0 %v1297
      %1404 = vmatprep.subr.mxu0 0.0
      %1405 = vmatpush1.msra.mxu0 %v1303
      %1406 = vmatprep.subr.mxu0 0.0
      %1407 = vmatpush1.msra.mxu0 %v1305
      %1408 = vmatprep.subr.mxu0 0.0
      %1409 = vmatpush1.msra.mxu0 %v1307
      %1410 = vmatprep.subr.mxu0 0.0
      %1411 = vmatpush1.msra.mxu0 %v1309
      %1412 = vmatprep.subr.mxu0 0.0
      %1413 = vmatpush1.msra.mxu0 %v1315
      %1414 = vmatprep.subr.mxu0 0.0
      %1415 = vmatpush1.msra.mxu0 %v1317
      %1416 = vmatprep.subr.mxu0 0.0
      %1417 = vmatpush1.msra.mxu0 %v1319
      %1418 = vmatprep.subr.mxu0 0.0
      %1419 = vmatpush1.msra.mxu0 %v1321
      %1420 = vmatprep.subr.mxu0 0.0
      %1421 = vmatpush1.msra.mxu0 %v1327
      %1422 = vmatprep.subr.mxu0 0.0
      %1423 = vmatpush1.msra.mxu0 %v1329
      %1424 = vmatprep.subr.mxu0 0.0
      %1425 = vmatpush1.msra.mxu0 %v1331
      %1426 = vmatprep.subr.mxu0 0.0
      %1427 = vmatpush1.msra.mxu0 %v1333
      %1428 = vmatprep.subr.mxu0 0.0
      %1429 = vmatpush1.msra.mxu0 %v1339
      %1430 = vmatprep.subr.mxu0 0.0
      %1431 = vmatpush1.msra.mxu0 %v1341
      %1432 = vmatprep.subr.mxu0 0.0
      %1433 = vmatpush1.msra.mxu0 %v1343
      %1434 = vmatprep.subr.mxu0 0.0
      %1435 = vmatpush1.msra.mxu0 %v1345
      %1436 = vmatprep.subr.mxu0 0.0
      %1437 = vmatpush1.msra.mxu0 %v1351
      %1438 = vmatprep.subr.mxu0 0.0
      %1439 = vmatpush1.msra.mxu0 %v1353
      %1440 = vmatprep.subr.mxu0 0.0
      %1441 = vmatpush1.msra.mxu0 %v1355
      %1442 = vmatprep.subr.mxu0 0.0
      %1443 = vmatpush1.msra.mxu0 %v1357
      %1444 = vmatprep.mubr.f32.mxu0 %v1375
      %1445 = vmatmul.mubr.f32.gmra.mrb[0].mxu0 %v1374
      %v1446 = vpop.f32.mrb[0].mxu0
      %v1447 = vadd.f32 0.0, %v1446
      %v1448 = vpop.f32.mrb[0].mxu0
      %1449 = vdwg.mxu0
      %1450 = vmatprep.subr.mxu0 0.0
      %1451 = vmatpush1.msra.mxu0 %v1363
      %1452 = vmatprep.subr.mxu0 0.0
      %1453 = vmatpush1.msra.mxu0 %v1365
      %1454 = vmatprep.subr.mxu0 0.0
      %1455 = vmatpush1.msra.mxu0 %v1367
      %1456 = vmatprep.subr.mxu0 0.0
      %1457 = vmatpush1.msra.mxu0 %v1369
      %1458 = vmatprep.subr.mxu0 0.0
      %1459 = vmatpush1.msra.mxu0 0.0
      %1460 = vmatprep.subr.mxu0 0.0
      %1461 = vmatpush1.msra.mxu0 0.0
      %1462 = vmatprep.subr.mxu0 0.0
      %1463 = vmatpush1.msra.mxu0 0.0
      %1464 = vmatprep.subr.mxu0 0.0
      %1465 = vmatpush1.msra.mxu0 0.0
      %1466 = vmatprep.subr.mxu0 0.0
      %1467 = vmatpush1.msra.mxu0 0.0
      %1468 = vmatprep.subr.mxu0 0.0
      %1469 = vmatpush1.msra.mxu0 0.0
      %1470 = vmatprep.subr.mxu0 0.0
      %1471 = vmatpush1.msra.mxu0 0.0
      %1472 = vmatprep.subr.mxu0 0.0
      %1473 = vmatpush1.msra.mxu0 0.0
      %1474 = vmatprep.subr.mxu0 0.0
      %1475 = vmatpush1.msra.mxu0 0.0
      %1476 = vmatprep.subr.mxu0 0.0
      %1477 = vmatpush1.msra.mxu0 0.0
      %1478 = vmatprep.subr.mxu0 0.0
      %1479 = vmatpush1.msra.mxu0 0.0
      %1480 = vmatprep.subr.mxu0 0.0
      %1481 = vmatpush1.msra.mxu0 0.0
      %1482 = vmatprep.subr.mxu0 0.0
      %1483 = vmatpush1.msra.mxu0 0.0
      %1484 = vmatprep.subr.mxu0 0.0
      %1485 = vmatpush1.msra.mxu0 0.0
      %1486 = vmatprep.subr.mxu0 0.0
      %1487 = vmatpush1.msra.mxu0 0.0
      %1488 = vmatprep.subr.mxu0 0.0
      %1489 = vmatpush1.msra.mxu0 0.0
      %1490 = vmatprep.subr.mxu0 0.0
      %1491 = vmatpush1.msra.mxu0 0.0
      %1492 = vmatprep.subr.mxu0 0.0
      %1493 = vmatpush1.msra.mxu0 0.0
      %1494 = vmatprep.subr.mxu0 0.0
      %1495 = vmatpush1.msra.mxu0 0.0
      %1496 = vmatprep.subr.mxu0 0.0
      %1497 = vmatpush1.msra.mxu0 0.0
      %1498 = vmatprep.subr.mxu0 0.0
      %1499 = vmatpush1.msra.mxu0 0.0
      %1500 = vmatprep.subr.mxu0 0.0
      %1501 = vmatpush1.msra.mxu0 0.0
      %1502 = vmatprep.subr.mxu0 0.0
      %1503 = vmatpush1.msra.mxu0 0.0
      %1504 = vmatprep.subr.mxu0 0.0
      %1505 = vmatpush1.msra.mxu0 0.0
      %1506 = vmatprep.subr.mxu0 0.0
      %1507 = vmatpush1.msra.mxu0 0.0
      %1508 = vmatprep.subr.mxu0 0.0
      %1509 = vmatpush1.msra.mxu0 0.0
      %1510 = vmatprep.subr.mxu0 0.0
      %1511 = vmatpush1.msra.mxu0 0.0
      %1512 = vmatprep.subr.mxu0 0.0
      %1513 = vmatpush1.msra.mxu0 0.0
      %1514 = vmatprep.mubr.f32.mxu0 0.0
      %1515 = vmatmul.mubr.f32.gmra.mrb[0].mxu0 %v1378
      %v1516 = vpop.f32.mrb[0].mxu0
      %v1517 = vadd.f32 %v1447, %v1516
      %v1518 = vpop.f32.mrb[0].mxu0
      %1519 = vdwg.mxu0
      %vm1520 = vcmask 654336
      %1521 = vst.msk [vmem:[%s223] sm:$0xff] %vm1520, %v1517
      %p1522 = scmp.lt.s32.totalorder %s17, 1
      %s1523 = scalar_select %p1522, %s17, 1
      %s1524 = smul.addr %s1523, 8
      %s1525 = scalar_lea.vmem %s5, %s1524
      // Predicated region
      $region41: #{down2_forward.1} parent=39 // pred_check
        %p1526 = pneg %p145
      $region42: #{down2_forward.1} parent=39 // pred_check_branch
        %1528 = sbr.rel (%p1526) target = $region44
      $region43: #{down2_forward.1} parent=39 // pred_region
        _
      $region44: #{down2_forward.1} parent=39 // pred_fallthru
        _
    $region40: #{down2_forward.1} parent=5 // pred_fallthru
      _
    %p1529 = scmp.le.s32.totalorder 2, %s12
    // Predicated region
    $region45: #{down2_forward.1} parent=5 // pred_check
      %p1530 = pneg %p1529
    $region46: #{down2_forward.1} parent=5 // pred_check_branch
      %1532 = sbr.rel (%p1530) target = $region48
    $region47: #{down2_forward.1} parent=5 // pred_region
      %s1533 = ssub.s32 %s12, 2
      // Predicated region
      $region49: #{down2_forward.1} parent=47 // pred_check
        %p1534 = pneg %p151
      $region50: #{down2_forward.1} parent=47 // pred_check_branch
        %1536 = sbr.rel (%p1534) target = $region52
      $region51: #{down2_forward.1} parent=47 // pred_region
        %p1537 = scmp.lt.s32.totalorder %s18, 1
        %s1538 = scalar_select %p1537, %s18, 1
        %s1539 = smul.addr %s1538, 8
        %s1540 = scalar_lea.vmem %s5, %s1539
      $region52: #{down2_forward.1} parent=47 // pred_fallthru
        _
    $region48: #{down2_forward.1} parent=5 // pred_fallthru
      _
  $region6: #{down2_forward.1} parent=0 // loop_footer
    %s16 = sadd.s32 1, %s12
  $region7: #{down2_forward.1} parent=0 // loop_footer_branch
    %11 = sbr.rel target = $region3
  $region8: #{down2_forward.1} parent=0 // loop_exit
    _

</llo_original>
